<compile_context>
chip_gen: v7x
topology: tpu7x:2x2x1
jax: 0.10.0
libtpu: 0.0.40
codegen_flags: <defaults>
</compile_context>

<pallas_src>
import math

import jax
import jax.numpy as jnp
from jax.experimental import pallas as pl
from jax.experimental.pallas import tpu as pltpu


def _gelu_exact(v):
    # Matches torch.nn.GELU() default (erf-based).
    # TODO(synk): with accuracy sign-off, a tanh-approx GELU (exp/tanh on the
    # EUP) would cut per-element VPU work further; kept exact for parity.
    return 0.5 * v * (1.0 + jax.lax.erf(v * (1.0 / math.sqrt(2.0))))


def _round_up(v, m):
    return (v + m - 1) // m * m


# --------------------------------------------------------------------------
# Stage 1: per-token projections (small MXU matmuls), one grid step per batch.
# --------------------------------------------------------------------------
def _project_kernel(x0_ref, x_ref, y_ref, w1a_ref, w1b_ref, w1ct_ref, b1_ref,
                    a_ref, bt_ref):
    # a = x0 @ W1a + x @ W1b + b1                               (N1, D)
    a_ref[0] = (jnp.dot(x0_ref[0], w1a_ref[...],
                        preferred_element_type=jnp.float32)
                + jnp.dot(x_ref[0], w1b_ref[...],
                          preferred_element_type=jnp.float32)
                + b1_ref[...])
    # bT = W1c^T @ y^T  (== (y @ W1c)^T), produced directly via the
    # rhs-transposed MXU contraction (the q @ k^T pattern) so no wrapper-side
    # transpose of y and no in-kernel XLU transpose is needed.   (D, N2)
    bt_ref[0] = jax.lax.dot_general(
        w1ct_ref[...], y_ref[0],
        dimension_numbers=(((1,), (1,)), ((), ())),
        preferred_element_type=jnp.float32)


# --------------------------------------------------------------------------
# Stage 2: cross cube as a D-unrolled FMA loop into a (tn1, tn2) accumulator.
# --------------------------------------------------------------------------
def _cross_kernel(a_ref, bt_ref, w2_ref, b2_ref, o_ref):
    tn1 = a_ref.shape[1]
    d_dim = bt_ref.shape[1]
    tn2 = bt_ref.shape[2]

    # b2 folded into the accumulator init (saves a full VPU pass per tile).
    acc = jnp.full((tn1, tn2), b2_ref[0], dtype=jnp.float32)

    # Static unroll over D (D = config.dim is a compile-time constant).  Each
    # step is: sublane-varying a-column + lane-varying bT-row -> broadcast add
    # -> gelu -> scalar (SMEM) FMA into acc.  Working set stays at a few
    # (tn1, tn2) tiles; no cube intermediate, no XLU reduce.
    for d in range(d_dim):
        a_col = a_ref[0, :, d:d + 1]        # (tn1, 1)  varies along sublanes
        bt_row = bt_ref[0, d:d + 1, :]      # (1, tn2)  varies along lanes
        v = a_col + bt_row                  # (tn1, tn2)
        acc = acc + w2_ref[d] * _gelu_exact(v)

    o_ref[0] = acc


def cross_out_layer_2(x0, x, y, w1, b1, w2, b2):
    """Forward pass of CrossOutLayer_2.

    w1: (3D, D) = linear1.weight.T   b1: (D,) = linear1.bias
    w2: (D,)    = out.weight[0]      b2: (1,) = out.bias
    """
    B, N1, D = x.shape
    _, N2, _ = y.shape

    # ---- pad N1 to a multiple of 8 and N2 to a multiple of 128 so every
    # stage-2 block is (8,128)-aligned (lane-dense unmasked stores, bounded
    # VMEM); padded rows/cols are sliced off at the end. -----------------
    N1p = _round_up(N1, 8)
    N2p = _round_up(N2, 128)
    if N1p != N1:
        pad1 = ((0, 0), (0, N1p - N1), (0, 0))
        x0 = jnp.pad(x0, pad1)
        x = jnp.pad(x, pad1)
    if N2p != N2:
        y = jnp.pad(y, ((0, 0), (0, N2p - N2), (0, 0)))

    # ----- stage 1: projections -------------------------------------------
    w1a = w1[:D]                      # (D, D)   multiplies x0
    w1b = w1[D:2 * D]                 # (D, D)   multiplies x
    w1ct = w1[2 * D:].T               # (D, D) = W1c^T (tiny weight transpose)
    b1_2d = b1.reshape(1, D)

    s1_block_bytes = 4 * (3 * N1p * D + 2 * D * N2p + 3 * D * D + D)
    proj_cost = pl.CostEstimate(
        flops=2 * B * N1p * D * D * 2 + 2 * B * N2p * D * D,
        transcendentals=0,
        bytes_accessed=4 * B * (3 * N1p * D + 2 * D * N2p) + 4 * (3 * D * D + D),
    )
    a, bt = pl.pallas_call(
        _project_kernel,
        out_shape=(jax.ShapeDtypeStruct((B, N1p, D), jnp.float32),
                   jax.ShapeDtypeStruct((B, D, N2p), jnp.float32)),
        grid=(B,),
        in_specs=[
            pl.BlockSpec((1, N1p, D), lambda i: (i, 0, 0)),      # x0
            pl.BlockSpec((1, N1p, D), lambda i: (i, 0, 0)),      # x
            pl.BlockSpec((1, N2p, D), lambda i: (i, 0, 0)),      # y
            pl.BlockSpec((D, D), lambda i: (0, 0)),              # W1a
            pl.BlockSpec((D, D), lambda i: (0, 0)),              # W1b
            pl.BlockSpec((D, D), lambda i: (0, 0)),              # W1c^T
            pl.BlockSpec((1, D), lambda i: (0, 0)),              # b1
        ],
        out_specs=(pl.BlockSpec((1, N1p, D), lambda i: (i, 0, 0)),
                   pl.BlockSpec((1, D, N2p), lambda i: (i, 0, 0))),
        compiler_params=pltpu.CompilerParams(
            dimension_semantics=("parallel",),
            vmem_limit_bytes=int(min(48 << 20, max(4 << 20, 3 * s1_block_bytes)))),
        cost_estimate=proj_cost,
    )(x0, x, y, w1a, w1b, w1ct, b1_2d)

    # ----- stage 2: cross accumulation, tiled over (B, N2, N1) -------------
    # tn2: lane-dense (multiple of 128), up to 512.
    tn2 = 128
    for cand in (512, 384, 256, 128):
        if N2p % cand == 0:
            tn2 = cand
            break
    # tn1: multiple of 8, keep tn1*tn2 <= 8192 elems so the f32 accumulator
    # plus per-step gelu temps stay comfortably inside the 64-vreg budget.
    max_tn1 = max(8, (8192 // tn2) // 8 * 8)
    tn1 = 8
    for cand in range(min(max_tn1, N1p), 7, -8):
        if N1p % cand == 0:
            tn1 = cand
            break

    # Innermost grid axis = N1 tiles so the large (D, tn2) bT block keeps the
    # same block index across consecutive steps (stays resident, no re-DMA).
    grid = (B, N2p // tn2, N1p // tn1)

    w2_1d = w2.reshape(D)
    b2_1d = b2.reshape(1)

    s2_block_bytes = 4 * (tn1 * D + D * tn2 + tn1 * tn2)
    cross_cost = pl.CostEstimate(
        flops=4 * B * N1p * N2p * D,
        transcendentals=B * N1p * N2p * D,       # one erf per (p, q, d)
        bytes_accessed=4 * (B * N1p * D * (N2p // tn2) + B * D * N2p
                            + B * N1p * N2p + D + 1),
    )

    out = pl.pallas_call(
        _cross_kernel,
        out_shape=jax.ShapeDtypeStruct((B, N1p, N2p), jnp.float32),
        grid=grid,
        in_specs=[
            pl.BlockSpec((1, tn1, D), lambda b, j, i: (b, i, 0)),   # a
            pl.BlockSpec((1, D, tn2), lambda b, j, i: (b, 0, j)),   # bT (resident over i)
            pl.BlockSpec(memory_space=pltpu.MemorySpace.SMEM),      # w2 (scalars)
            pl.BlockSpec(memory_space=pltpu.MemorySpace.SMEM),      # b2 (scalar)
        ],
        out_specs=pl.BlockSpec((1, tn1, tn2), lambda b, j, i: (b, i, j)),
        compiler_params=pltpu.CompilerParams(
            dimension_semantics=("parallel", "parallel", "parallel"),
            vmem_limit_bytes=int(min(48 << 20, max(4 << 20, 4 * s2_block_bytes)))),
        cost_estimate=cross_cost,
    )(a, bt, w2_1d, b2_1d)

    if (N1p, N2p) != (N1, N2):
        out = out[:, :N1, :N2]
    return out


def reference(x0, x, y, w1, b1, w2, b2):
    n1, n2 = x.shape[1], y.shape[1]
    x0e = jnp.repeat(x0[:, :, None, :], n2, axis=2)
    xe = jnp.repeat(x[:, :, None, :], n2, axis=2)
    ye = jnp.repeat(y[:, None, :, :], n1, axis=1)
    inp = jnp.concatenate([x0e, xe, ye], axis=-1)      # (B, N1, N2, 3D)
    o1 = inp @ w1 + b1
    o2 = _gelu_exact(o1)
    o3 = o2 @ w2.reshape(-1, 1) + b2
    return o3[..., 0]


if __name__ == "__main__":
    B, N1, N2, D = 2, 8, 8, 32

    key = jax.random.PRNGKey(0)
    k_x0, k_x, k_y, k_w1, k_b1, k_w2, k_b2 = jax.random.split(key, 7)

    x0 = jax.random.normal(k_x0, (B, N1, D), dtype=jnp.float32)
    x = jax.random.normal(k_x, (B, N1, D), dtype=jnp.float32)
    y = jax.random.normal(k_y, (B, N2, D), dtype=jnp.float32)

    # synthetic parameters (shapes match the module __init__)
    w1 = jax.random.normal(k_w1, (3 * D, D), dtype=jnp.float32) * 0.05  # linear1.weight.T
    b1 = jax.random.normal(k_b1, (D,), dtype=jnp.float32) * 0.05        # linear1.bias
    w2 = jax.random.normal(k_w2, (D,), dtype=jnp.float32) * 0.05        # out.weight[0]
    b2 = jax.random.normal(k_b2, (1,), dtype=jnp.float32) * 0.05        # out.bias

    fwd = jax.jit(cross_out_layer_2)
    out = jax.block_until_ready(fwd(x0, x, y, w1, b1, w2, b2))

    ref = reference(x0, x, y, w1, b1, w2, b2)
    assert out.shape == (B, N1, N2)
    assert jnp.allclose(out, ref, atol=1e-4, rtol=1e-4), "mismatch vs reference"

    print("KERNEL_OK")
</pallas_src>

<mosaic_0001>
module attributes {stable_mosaic.version = 11 : i64} {
  func.func @_project_kernel(%arg0: i32, %arg1: memref<1x8x32xf32, #tpu.memory_space<vmem>>, %arg2: memref<1x8x32xf32, #tpu.memory_space<vmem>>, %arg3: memref<1x128x32xf32, #tpu.memory_space<vmem>>, %arg4: memref<32x32xf32, #tpu.memory_space<vmem>>, %arg5: memref<32x32xf32, #tpu.memory_space<vmem>>, %arg6: memref<32x32xf32, #tpu.memory_space<vmem>>, %arg7: memref<1x32xf32, #tpu.memory_space<vmem>>, %arg8: memref<1x8x32xf32, #tpu.memory_space<vmem>>, %arg9: memref<1x32x128xf32, #tpu.memory_space<vmem>>) attributes {dimension_semantics = [#tpu.dimension_semantics<parallel>], iteration_bounds = array<i64: 2>, scalar_prefetch = 0 : i64, scratch_operands = 0 : i64, tpu.core_type = #tpu.core_type<tc>, window_params = [{transform_indices = @transform_0, window_bounds = array<i64: 1, 8, 32>}, {transform_indices = @transform_1, window_bounds = array<i64: 1, 8, 32>}, {transform_indices = @transform_2, window_bounds = array<i64: 1, 128, 32>}, {pipeline_mode = #tpu.pipeline_mode<synchronous>, transform_indices = @transform_3, window_bounds = array<i64: 32, 32>}, {pipeline_mode = #tpu.pipeline_mode<synchronous>, transform_indices = @transform_4, window_bounds = array<i64: 32, 32>}, {pipeline_mode = #tpu.pipeline_mode<synchronous>, transform_indices = @transform_5, window_bounds = array<i64: 32, 32>}, {pipeline_mode = #tpu.pipeline_mode<synchronous>, transform_indices = @transform_6, window_bounds = array<i64: 1, 32>}, {transform_indices = @transform_7, window_bounds = array<i64: 1, 8, 32>}, {transform_indices = @transform_8, window_bounds = array<i64: 1, 32, 128>}]} {
    %c0 = arith.constant 0 : index
    %c0_0 = arith.constant 0 : index
    %c0_1 = arith.constant 0 : index
    %0 = vector.load %arg1[%c0, %c0_0, %c0_1] : memref<1x8x32xf32, #tpu.memory_space<vmem>>, vector<1x8x32xf32>
    %1 = vector.shape_cast %0 : vector<1x8x32xf32> to vector<8x32xf32>
    %c0_2 = arith.constant 0 : index
    %c0_3 = arith.constant 0 : index
    %2 = vector.load %arg4[%c0_2, %c0_3] : memref<32x32xf32, #tpu.memory_space<vmem>>, vector<32x32xf32>
    %cst = arith.constant dense<0.000000e+00> : vector<8x32xf32>
    %3 = tpu.matmul %1, %2, %cst {dimension_numbers = #tpu.dot_dimension_numbers<[1], [0], [0], [1], [0, 0, 1, 1], [], []>} : vector<8x32xf32>, vector<32x32xf32>, vector<8x32xf32> -> vector<8x32xf32>
    %c0_4 = arith.constant 0 : index
    %c0_5 = arith.constant 0 : index
    %c0_6 = arith.constant 0 : index
    %4 = vector.load %arg2[%c0_4, %c0_5, %c0_6] : memref<1x8x32xf32, #tpu.memory_space<vmem>>, vector<1x8x32xf32>
    %5 = vector.shape_cast %4 : vector<1x8x32xf32> to vector<8x32xf32>
    %c0_7 = arith.constant 0 : index
    %c0_8 = arith.constant 0 : index
    %6 = vector.load %arg5[%c0_7, %c0_8] : memref<32x32xf32, #tpu.memory_space<vmem>>, vector<32x32xf32>
    %cst_9 = arith.constant dense<0.000000e+00> : vector<8x32xf32>
    %7 = tpu.matmul %5, %6, %cst_9 {dimension_numbers = #tpu.dot_dimension_numbers<[1], [0], [0], [1], [0, 0, 1, 1], [], []>} : vector<8x32xf32>, vector<32x32xf32>, vector<8x32xf32> -> vector<8x32xf32>
    %8 = arith.addf %3, %7 : vector<8x32xf32>
    %c0_10 = arith.constant 0 : index
    %c0_11 = arith.constant 0 : index
    %9 = vector.load %arg7[%c0_10, %c0_11] : memref<1x32xf32, #tpu.memory_space<vmem>>, vector<1x32xf32>
    %10 = vector.broadcast %9 : vector<1x32xf32> to vector<8x32xf32>
    %11 = arith.addf %8, %10 : vector<8x32xf32>
    %c0_12 = arith.constant 0 : index
    %c0_13 = arith.constant 0 : index
    %c0_14 = arith.constant 0 : index
    %12 = vector.load %arg8[%c0_12, %c0_13, %c0_14] : memref<1x8x32xf32, #tpu.memory_space<vmem>>, vector<1x8x32xf32>
    %13 = vector.shape_cast %12 : vector<1x8x32xf32> to vector<8x32xf32>
    %14 = vector.shape_cast %11 : vector<8x32xf32> to vector<1x8x32xf32>
    tpu.vector_store %arg8[%c0_12, %c0_13, %c0_14], %14 {strides = array<i32>} : memref<1x8x32xf32, #tpu.memory_space<vmem>>, vector<1x8x32xf32>,
    %c0_15 = arith.constant 0 : index
    %c0_16 = arith.constant 0 : index
    %15 = vector.load %arg6[%c0_15, %c0_16] : memref<32x32xf32, #tpu.memory_space<vmem>>, vector<32x32xf32>
    %c0_17 = arith.constant 0 : index
    %c0_18 = arith.constant 0 : index
    %c0_19 = arith.constant 0 : index
    %16 = vector.load %arg3[%c0_17, %c0_18, %c0_19] : memref<1x128x32xf32, #tpu.memory_space<vmem>>, vector<1x128x32xf32>
    %17 = vector.shape_cast %16 : vector<1x128x32xf32> to vector<128x32xf32>
    %cst_20 = arith.constant dense<0.000000e+00> : vector<32x128xf32>
    %18 = tpu.matmul %15, %17, %cst_20 {dimension_numbers = #tpu.dot_dimension_numbers<[1], [1], [0], [0], [0, 0, 1, 0], [], []>} : vector<32x32xf32>, vector<128x32xf32>, vector<32x128xf32> -> vector<32x128xf32>
    %c0_21 = arith.constant 0 : index
    %c0_22 = arith.constant 0 : index
    %c0_23 = arith.constant 0 : index
    %19 = vector.load %arg9[%c0_21, %c0_22, %c0_23] : memref<1x32x128xf32, #tpu.memory_space<vmem>>, vector<1x32x128xf32>
    %20 = vector.shape_cast %19 : vector<1x32x128xf32> to vector<32x128xf32>
    %21 = vector.shape_cast %18 : vector<32x128xf32> to vector<1x32x128xf32>
    tpu.vector_store %arg9[%c0_21, %c0_22, %c0_23], %21 {strides = array<i32>} : memref<1x32x128xf32, #tpu.memory_space<vmem>>, vector<1x32x128xf32>,
    return
  }
  func.func @transform_0(%arg0: i32) -> (i32, i32, i32) {
    %c0_i32 = arith.constant 0 : i32
    %c0_i32_0 = arith.constant 0 : i32
    %c0_i32_1 = arith.constant 0 : i32
    return %arg0, %c0_i32, %c0_i32_0 : i32, i32, i32
  }
  func.func @transform_1(%arg0: i32) -> (i32, i32, i32) {
    %c0_i32 = arith.constant 0 : i32
    %c0_i32_0 = arith.constant 0 : i32
    %c0_i32_1 = arith.constant 0 : i32
    return %arg0, %c0_i32, %c0_i32_0 : i32, i32, i32
  }
  func.func @transform_2(%arg0: i32) -> (i32, i32, i32) {
    %c0_i32 = arith.constant 0 : i32
    %c0_i32_0 = arith.constant 0 : i32
    %c0_i32_1 = arith.constant 0 : i32
    return %arg0, %c0_i32, %c0_i32_0 : i32, i32, i32
  }
  func.func @transform_3(%arg0: i32) -> (i32, i32) {
    %c0_i32 = arith.constant 0 : i32
    %c0_i32_0 = arith.constant 0 : i32
    %c0_i32_1 = arith.constant 0 : i32
    return %c0_i32, %c0_i32_0 : i32, i32
  }
  func.func @transform_4(%arg0: i32) -> (i32, i32) {
    %c0_i32 = arith.constant 0 : i32
    %c0_i32_0 = arith.constant 0 : i32
    %c0_i32_1 = arith.constant 0 : i32
    return %c0_i32, %c0_i32_0 : i32, i32
  }
  func.func @transform_5(%arg0: i32) -> (i32, i32) {
    %c0_i32 = arith.constant 0 : i32
    %c0_i32_0 = arith.constant 0 : i32
    %c0_i32_1 = arith.constant 0 : i32
    return %c0_i32, %c0_i32_0 : i32, i32
  }
  func.func @transform_6(%arg0: i32) -> (i32, i32) {
    %c0_i32 = arith.constant 0 : i32
    %c0_i32_0 = arith.constant 0 : i32
    %c0_i32_1 = arith.constant 0 : i32
    return %c0_i32, %c0_i32_0 : i32, i32
  }
  func.func @transform_7(%arg0: i32) -> (i32, i32, i32) {
    %c0_i32 = arith.constant 0 : i32
    %c0_i32_0 = arith.constant 0 : i32
    %c0_i32_1 = arith.constant 0 : i32
    return %arg0, %c0_i32, %c0_i32_0 : i32, i32, i32
  }
  func.func @transform_8(%arg0: i32) -> (i32, i32, i32) {
    %c0_i32 = arith.constant 0 : i32
    %c0_i32_0 = arith.constant 0 : i32
    %c0_i32_1 = arith.constant 0 : i32
    return %arg0, %c0_i32, %c0_i32_0 : i32, i32, i32
  }
}

module attributes {stable_mosaic.version = 11 : i64} {
  func.func @_cross_kernel(%arg0: i32, %arg1: i32, %arg2: i32, %arg3: memref<1x8x32xf32, #tpu.memory_space<vmem>>, %arg4: memref<1x32x128xf32, #tpu.memory_space<vmem>>, %arg5: memref<32xf32, #tpu.memory_space<smem>>, %arg6: memref<1xf32, #tpu.memory_space<smem>>, %arg7: memref<1x8x128xf32, #tpu.memory_space<vmem>>) attributes {dimension_semantics = [#tpu.dimension_semantics<parallel>, #tpu.dimension_semantics<parallel>, #tpu.dimension_semantics<parallel>], iteration_bounds = array<i64: 2, 1, 1>, scalar_prefetch = 0 : i64, scratch_operands = 0 : i64, tpu.core_type = #tpu.core_type<tc>, window_params = [{transform_indices = @transform_0, window_bounds = array<i64: 1, 8, 32>}, {transform_indices = @transform_1, window_bounds = array<i64: 1, 32, 128>}, {transform_indices = @transform_2, window_bounds = array<i64: 32>}, {transform_indices = @transform_3, window_bounds = array<i64: 1>}, {transform_indices = @transform_4, window_bounds = array<i64: 1, 8, 128>}]} {
    %c0 = arith.constant 0 : index
    %0 = memref.load %arg6[%c0] : memref<1xf32, #tpu.memory_space<smem>>
    %1 = vector.broadcast %0 : f32 to vector<8x128xf32>
    %c0_0 = arith.constant 0 : index
    %c0_1 = arith.constant 0 : index
    %c0_2 = arith.constant 0 : index
    %2 = vector.load %arg3[%c0_0, %c0_1, %c0_2] : memref<1x8x32xf32, #tpu.memory_space<vmem>>, vector<1x8x1xf32>
    %3 = vector.shape_cast %2 : vector<1x8x1xf32> to vector<8x1xf32>
    %c0_3 = arith.constant 0 : index
    %c0_4 = arith.constant 0 : index
    %c0_5 = arith.constant 0 : index
    %4 = vector.load %arg4[%c0_3, %c0_4, %c0_5] : memref<1x32x128xf32, #tpu.memory_space<vmem>>, vector<1x1x128xf32>
    %5 = vector.shape_cast %4 : vector<1x1x128xf32> to vector<1x128xf32>
    %6 = vector.broadcast %3 : vector<8x1xf32> to vector<8x128xf32>
    %7 = vector.broadcast %5 : vector<1x128xf32> to vector<8x128xf32>
    %8 = arith.addf %6, %7 : vector<8x128xf32>
    %c0_6 = arith.constant 0 : index
    %9 = memref.load %arg5[%c0_6] : memref<32xf32, #tpu.memory_space<smem>>
    %cst = arith.constant 5.000000e-01 : f32
    %10 = vector.broadcast %cst : f32 to vector<8x128xf32>
    %11 = arith.mulf %10, %8 : vector<8x128xf32>
    %cst_7 = arith.constant 0.707106769 : f32
    %12 = vector.broadcast %cst_7 : f32 to vector<8x128xf32>
    %13 = arith.mulf %8, %12 : vector<8x128xf32>
    %14 = math.erf %13 : vector<8x128xf32>
    %cst_8 = arith.constant 1.000000e+00 : f32
    %15 = vector.broadcast %cst_8 : f32 to vector<8x128xf32>
    %16 = arith.addf %15, %14 : vector<8x128xf32>
    %17 = arith.mulf %11, %16 : vector<8x128xf32>
    %18 = vector.broadcast %9 : f32 to vector<8x128xf32>
    %19 = arith.mulf %18, %17 : vector<8x128xf32>
    %20 = arith.addf %1, %19 : vector<8x128xf32>
    %c0_9 = arith.constant 0 : index
    %c0_10 = arith.constant 0 : index
    %c1 = arith.constant 1 : index
    %21 = vector.load %arg3[%c0_9, %c0_10, %c1] : memref<1x8x32xf32, #tpu.memory_space<vmem>>, vector<1x8x1xf32>
    %22 = vector.shape_cast %21 : vector<1x8x1xf32> to vector<8x1xf32>
    %c0_11 = arith.constant 0 : index
    %c1_12 = arith.constant 1 : index
    %c0_13 = arith.constant 0 : index
    %23 = vector.load %arg4[%c0_11, %c1_12, %c0_13] : memref<1x32x128xf32, #tpu.memory_space<vmem>>, vector<1x1x128xf32>
    %24 = vector.shape_cast %23 : vector<1x1x128xf32> to vector<1x128xf32>
    %25 = vector.broadcast %22 : vector<8x1xf32> to vector<8x128xf32>
    %26 = vector.broadcast %24 : vector<1x128xf32> to vector<8x128xf32>
    %27 = arith.addf %25, %26 : vector<8x128xf32>
    %c1_14 = arith.constant 1 : index
    %28 = memref.load %arg5[%c1_14] : memref<32xf32, #tpu.memory_space<smem>>
    %cst_15 = arith.constant 5.000000e-01 : f32
    %29 = vector.broadcast %cst_15 : f32 to vector<8x128xf32>
    %30 = arith.mulf %29, %27 : vector<8x128xf32>
    %cst_16 = arith.constant 0.707106769 : f32
    %31 = vector.broadcast %cst_16 : f32 to vector<8x128xf32>
    %32 = arith.mulf %27, %31 : vector<8x128xf32>
    %33 = math.erf %32 : vector<8x128xf32>
    %cst_17 = arith.constant 1.000000e+00 : f32
    %34 = vector.broadcast %cst_17 : f32 to vector<8x128xf32>
    %35 = arith.addf %34, %33 : vector<8x128xf32>
    %36 = arith.mulf %30, %35 : vector<8x128xf32>
    %37 = vector.broadcast %28 : f32 to vector<8x128xf32>
    %38 = arith.mulf %37, %36 : vector<8x128xf32>
    %39 = arith.addf %20, %38 : vector<8x128xf32>
    %c0_18 = arith.constant 0 : index
    %c0_19 = arith.constant 0 : index
    %c2 = arith.constant 2 : index
    %40 = vector.load %arg3[%c0_18, %c0_19, %c2] : memref<1x8x32xf32, #tpu.memory_space<vmem>>, vector<1x8x1xf32>
    %41 = vector.shape_cast %40 : vector<1x8x1xf32> to vector<8x1xf32>
    %c0_20 = arith.constant 0 : index
    %c2_21 = arith.constant 2 : index
    %c0_22 = arith.constant 0 : index
    %42 = vector.load %arg4[%c0_20, %c2_21, %c0_22] : memref<1x32x128xf32, #tpu.memory_space<vmem>>, vector<1x1x128xf32>
    %43 = vector.shape_cast %42 : vector<1x1x128xf32> to vector<1x128xf32>
    %44 = vector.broadcast %41 : vector<8x1xf32> to vector<8x128xf32>
    %45 = vector.broadcast %43 : vector<1x128xf32> to vector<8x128xf32>
    %46 = arith.addf %44, %45 : vector<8x128xf32>
    %c2_23 = arith.constant 2 : index
    %47 = memref.load %arg5[%c2_23] : memref<32xf32, #tpu.memory_space<smem>>
    %cst_24 = arith.constant 5.000000e-01 : f32
    %48 = vector.broadcast %cst_24 : f32 to vector<8x128xf32>
    %49 = arith.mulf %48, %46 : vector<8x128xf32>
    %cst_25 = arith.constant 0.707106769 : f32
    %50 = vector.broadcast %cst_25 : f32 to vector<8x128xf32>
    %51 = arith.mulf %46, %50 : vector<8x128xf32>
    %52 = math.erf %51 : vector<8x128xf32>
    %cst_26 = arith.constant 1.000000e+00 : f32
    %53 = vector.broadcast %cst_26 : f32 to vector<8x128xf32>
    %54 = arith.addf %53, %52 : vector<8x128xf32>
    %55 = arith.mulf %49, %54 : vector<8x128xf32>
    %56 = vector.broadcast %47 : f32 to vector<8x128xf32>
    %57 = arith.mulf %56, %55 : vector<8x128xf32>
    %58 = arith.addf %39, %57 : vector<8x128xf32>
    %c0_27 = arith.constant 0 : index
    %c0_28 = arith.constant 0 : index
    %c3 = arith.constant 3 : index
    %59 = vector.load %arg3[%c0_27, %c0_28, %c3] : memref<1x8x32xf32, #tpu.memory_space<vmem>>, vector<1x8x1xf32>
    %60 = vector.shape_cast %59 : vector<1x8x1xf32> to vector<8x1xf32>
    %c0_29 = arith.constant 0 : index
    %c3_30 = arith.constant 3 : index
    %c0_31 = arith.constant 0 : index
    %61 = vector.load %arg4[%c0_29, %c3_30, %c0_31] : memref<1x32x128xf32, #tpu.memory_space<vmem>>, vector<1x1x128xf32>
    %62 = vector.shape_cast %61 : vector<1x1x128xf32> to vector<1x128xf32>
    %63 = vector.broadcast %60 : vector<8x1xf32> to vector<8x128xf32>
    %64 = vector.broadcast %62 : vector<1x128xf32> to vector<8x128xf32>
    %65 = arith.addf %63, %64 : vector<8x128xf32>
    %c3_32 = arith.constant 3 : index
    %66 = memref.load %arg5[%c3_32] : memref<32xf32, #tpu.memory_space<smem>>
    %cst_33 = arith.constant 5.000000e-01 : f32
    %67 = vector.broadcast %cst_33 : f32 to vector<8x128xf32>
    %68 = arith.mulf %67, %65 : vector<8x128xf32>
    %cst_34 = arith.constant 0.707106769 : f32
    %69 = vector.broadcast %cst_34 : f32 to vector<8x128xf32>
    %70 = arith.mulf %65, %69 : vector<8x128xf32>
    %71 = math.erf %70 : vector<8x128xf32>
    %cst_35 = arith.constant 1.000000e+00 : f32
    %72 = vector.broadcast %cst_35 : f32 to vector<8x128xf32>
    %73 = arith.addf %72, %71 : vector<8x128xf32>
    %74 = arith.mulf %68, %73 : vector<8x128xf32>
    %75 = vector.broadcast %66 : f32 to vector<8x128xf32>
    %76 = arith.mulf %75, %74 : vector<8x128xf32>
    %77 = arith.addf %58, %76 : vector<8x128xf32>
    %c0_36 = arith.constant 0 : index
    %c0_37 = arith.constant 0 : index
    %c4 = arith.constant 4 : index
    %78 = vector.load %arg3[%c0_36, %c0_37, %c4] : memref<1x8x32xf32, #tpu.memory_space<vmem>>, vector<1x8x1xf32>
    %79 = vector.shape_cast %78 : vector<1x8x1xf32> to vector<8x1xf32>
    %c0_38 = arith.constant 0 : index
    %c4_39 = arith.constant 4 : index
    %c0_40 = arith.constant 0 : index
    %80 = vector.load %arg4[%c0_38, %c4_39, %c0_40] : memref<1x32x128xf32, #tpu.memory_space<vmem>>, vector<1x1x128xf32>
    %81 = vector.shape_cast %80 : vector<1x1x128xf32> to vector<1x128xf32>
    %82 = vector.broadcast %79 : vector<8x1xf32> to vector<8x128xf32>
    %83 = vector.broadcast %81 : vector<1x128xf32> to vector<8x128xf32>
    %84 = arith.addf %82, %83 : vector<8x128xf32>
    %c4_41 = arith.constant 4 : index
    %85 = memref.load %arg5[%c4_41] : memref<32xf32, #tpu.memory_space<smem>>
    %cst_42 = arith.constant 5.000000e-01 : f32
    %86 = vector.broadcast %cst_42 : f32 to vector<8x128xf32>
    %87 = arith.mulf %86, %84 : vector<8x128xf32>
    %cst_43 = arith.constant 0.707106769 : f32
    %88 = vector.broadcast %cst_43 : f32 to vector<8x128xf32>
    %89 = arith.mulf %84, %88 : vector<8x128xf32>
    %90 = math.erf %89 : vector<8x128xf32>
    %cst_44 = arith.constant 1.000000e+00 : f32
    %91 = vector.broadcast %cst_44 : f32 to vector<8x128xf32>
    %92 = arith.addf %91, %90 : vector<8x128xf32>
    %93 = arith.mulf %87, %92 : vector<8x128xf32>
    %94 = vector.broadcast %85 : f32 to vector<8x128xf32>
    %95 = arith.mulf %94, %93 : vector<8x128xf32>
    %96 = arith.addf %77, %95 : vector<8x128xf32>
    %c0_45 = arith.constant 0 : index
    %c0_46 = arith.constant 0 : index
    %c5 = arith.constant 5 : index
    %97 = vector.load %arg3[%c0_45, %c0_46, %c5] : memref<1x8x32xf32, #tpu.memory_space<vmem>>, vector<1x8x1xf32>
    %98 = vector.shape_cast %97 : vector<1x8x1xf32> to vector<8x1xf32>
    %c0_47 = arith.constant 0 : index
    %c5_48 = arith.constant 5 : index
    %c0_49 = arith.constant 0 : index
    %99 = vector.load %arg4[%c0_47, %c5_48, %c0_49] : memref<1x32x128xf32, #tpu.memory_space<vmem>>, vector<1x1x128xf32>
    %100 = vector.shape_cast %99 : vector<1x1x128xf32> to vector<1x128xf32>
    %101 = vector.broadcast %98 : vector<8x1xf32> to vector<8x128xf32>
    %102 = vector.broadcast %100 : vector<1x128xf32> to vector<8x128xf32>
    %103 = arith.addf %101, %102 : vector<8x128xf32>
    %c5_50 = arith.constant 5 : index
    %104 = memref.load %arg5[%c5_50] : memref<32xf32, #tpu.memory_space<smem>>
    %cst_51 = arith.constant 5.000000e-01 : f32
    %105 = vector.broadcast %cst_51 : f32 to vector<8x128xf32>
    %106 = arith.mulf %105, %103 : vector<8x128xf32>
    %cst_52 = arith.constant 0.707106769 : f32
    %107 = vector.broadcast %cst_52 : f32 to vector<8x128xf32>
    %108 = arith.mulf %103, %107 : vector<8x128xf32>
    %109 = math.erf %108 : vector<8x128xf32>
    %cst_53 = arith.constant 1.000000e+00 : f32
    %110 = vector.broadcast %cst_53 : f32 to vector<8x128xf32>
    %111 = arith.addf %110, %109 : vector<8x128xf32>
    %112 = arith.mulf %106, %111 : vector<8x128xf32>
    %113 = vector.broadcast %104 : f32 to vector<8x128xf32>
    %114 = arith.mulf %113, %112 : vector<8x128xf32>
    %115 = arith.addf %96, %114 : vector<8x128xf32>
    %c0_54 = arith.constant 0 : index
    %c0_55 = arith.constant 0 : index
    %c6 = arith.constant 6 : index
    %116 = vector.load %arg3[%c0_54, %c0_55, %c6] : memref<1x8x32xf32, #tpu.memory_space<vmem>>, vector<1x8x1xf32>
    %117 = vector.shape_cast %116 : vector<1x8x1xf32> to vector<8x1xf32>
    %c0_56 = arith.constant 0 : index
    %c6_57 = arith.constant 6 : index
    %c0_58 = arith.constant 0 : index
    %118 = vector.load %arg4[%c0_56, %c6_57, %c0_58] : memref<1x32x128xf32, #tpu.memory_space<vmem>>, vector<1x1x128xf32>
    %119 = vector.shape_cast %118 : vector<1x1x128xf32> to vector<1x128xf32>
    %120 = vector.broadcast %117 : vector<8x1xf32> to vector<8x128xf32>
    %121 = vector.broadcast %119 : vector<1x128xf32> to vector<8x128xf32>
    %122 = arith.addf %120, %121 : vector<8x128xf32>
    %c6_59 = arith.constant 6 : index
    %123 = memref.load %arg5[%c6_59] : memref<32xf32, #tpu.memory_space<smem>>
    %cst_60 = arith.constant 5.000000e-01 : f32
    %124 = vector.broadcast %cst_60 : f32 to vector<8x128xf32>
    %125 = arith.mulf %124, %122 : vector<8x128xf32>
    %cst_61 = arith.constant 0.707106769 : f32
    %126 = vector.broadcast %cst_61 : f32 to vector<8x128xf32>
    %127 = arith.mulf %122, %126 : vector<8x128xf32>
    %128 = math.erf %127 : vector<8x128xf32>
    %cst_62 = arith.constant 1.000000e+00 : f32
    %129 = vector.broadcast %cst_62 : f32 to vector<8x128xf32>
    %130 = arith.addf %129, %128 : vector<8x128xf32>
    %131 = arith.mulf %125, %130 : vector<8x128xf32>
    %132 = vector.broadcast %123 : f32 to vector<8x128xf32>
    %133 = arith.mulf %132, %131 : vector<8x128xf32>
    %134 = arith.addf %115, %133 : vector<8x128xf32>
    %c0_63 = arith.constant 0 : index
    %c0_64 = arith.constant 0 : index
    %c7 = arith.constant 7 : index
    %135 = vector.load %arg3[%c0_63, %c0_64, %c7] : memref<1x8x32xf32, #tpu.memory_space<vmem>>, vector<1x8x1xf32>
    %136 = vector.shape_cast %135 : vector<1x8x1xf32> to vector<8x1xf32>
    %c0_65 = arith.constant 0 : index
    %c7_66 = arith.constant 7 : index
    %c0_67 = arith.constant 0 : index
    %137 = vector.load %arg4[%c0_65, %c7_66, %c0_67] : memref<1x32x128xf32, #tpu.memory_space<vmem>>, vector<1x1x128xf32>
    %138 = vector.shape_cast %137 : vector<1x1x128xf32> to vector<1x128xf32>
    %139 = vector.broadcast %136 : vector<8x1xf32> to vector<8x128xf32>
    %140 = vector.broadcast %138 : vector<1x128xf32> to vector<8x128xf32>
    %141 = arith.addf %139, %140 : vector<8x128xf32>
    %c7_68 = arith.constant 7 : index
    %142 = memref.load %arg5[%c7_68] : memref<32xf32, #tpu.memory_space<smem>>
    %cst_69 = arith.constant 5.000000e-01 : f32
    %143 = vector.broadcast %cst_69 : f32 to vector<8x128xf32>
    %144 = arith.mulf %143, %141 : vector<8x128xf32>
    %cst_70 = arith.constant 0.707106769 : f32
    %145 = vector.broadcast %cst_70 : f32 to vector<8x128xf32>
    %146 = arith.mulf %141, %145 : vector<8x128xf32>
    %147 = math.erf %146 : vector<8x128xf32>
    %cst_71 = arith.constant 1.000000e+00 : f32
    %148 = vector.broadcast %cst_71 : f32 to vector<8x128xf32>
    %149 = arith.addf %148, %147 : vector<8x128xf32>
    %150 = arith.mulf %144, %149 : vector<8x128xf32>
    %151 = vector.broadcast %142 : f32 to vector<8x128xf32>
    %152 = arith.mulf %151, %150 : vector<8x128xf32>
    %153 = arith.addf %134, %152 : vector<8x128xf32>
    %c0_72 = arith.constant 0 : index
    %c0_73 = arith.constant 0 : index
    %c8 = arith.constant 8 : index
    %154 = vector.load %arg3[%c0_72, %c0_73, %c8] : memref<1x8x32xf32, #tpu.memory_space<vmem>>, vector<1x8x1xf32>
    %155 = vector.shape_cast %154 : vector<1x8x1xf32> to vector<8x1xf32>
    %c0_74 = arith.constant 0 : index
    %c8_75 = arith.constant 8 : index
    %c0_76 = arith.constant 0 : index
    %156 = vector.load %arg4[%c0_74, %c8_75, %c0_76] : memref<1x32x128xf32, #tpu.memory_space<vmem>>, vector<1x1x128xf32>
    %157 = vector.shape_cast %156 : vector<1x1x128xf32> to vector<1x128xf32>
    %158 = vector.broadcast %155 : vector<8x1xf32> to vector<8x128xf32>
    %159 = vector.broadcast %157 : vector<1x128xf32> to vector<8x128xf32>
    %160 = arith.addf %158, %159 : vector<8x128xf32>
    %c8_77 = arith.constant 8 : index
    %161 = memref.load %arg5[%c8_77] : memref<32xf32, #tpu.memory_space<smem>>
    %cst_78 = arith.constant 5.000000e-01 : f32
    %162 = vector.broadcast %cst_78 : f32 to vector<8x128xf32>
    %163 = arith.mulf %162, %160 : vector<8x128xf32>
    %cst_79 = arith.constant 0.707106769 : f32
    %164 = vector.broadcast %cst_79 : f32 to vector<8x128xf32>
    %165 = arith.mulf %160, %164 : vector<8x128xf32>
    %166 = math.erf %165 : vector<8x128xf32>
    %cst_80 = arith.constant 1.000000e+00 : f32
    %167 = vector.broadcast %cst_80 : f32 to vector<8x128xf32>
    %168 = arith.addf %167, %166 : vector<8x128xf32>
    %169 = arith.mulf %163, %168 : vector<8x128xf32>
    %170 = vector.broadcast %161 : f32 to vector<8x128xf32>
    %171 = arith.mulf %170, %169 : vector<8x128xf32>
    %172 = arith.addf %153, %171 : vector<8x128xf32>
    %c0_81 = arith.constant 0 : index
    %c0_82 = arith.constant 0 : index
    %c9 = arith.constant 9 : index
    %173 = vector.load %arg3[%c0_81, %c0_82, %c9] : memref<1x8x32xf32, #tpu.memory_space<vmem>>, vector<1x8x1xf32>
    %174 = vector.shape_cast %173 : vector<1x8x1xf32> to vector<8x1xf32>
    %c0_83 = arith.constant 0 : index
    %c9_84 = arith.constant 9 : index
    %c0_85 = arith.constant 0 : index
    %175 = vector.load %arg4[%c0_83, %c9_84, %c0_85] : memref<1x32x128xf32, #tpu.memory_space<vmem>>, vector<1x1x128xf32>
    %176 = vector.shape_cast %175 : vector<1x1x128xf32> to vector<1x128xf32>
    %177 = vector.broadcast %174 : vector<8x1xf32> to vector<8x128xf32>
    %178 = vector.broadcast %176 : vector<1x128xf32> to vector<8x128xf32>
    %179 = arith.addf %177, %178 : vector<8x128xf32>
    %c9_86 = arith.constant 9 : index
    %180 = memref.load %arg5[%c9_86] : memref<32xf32, #tpu.memory_space<smem>>
    %cst_87 = arith.constant 5.000000e-01 : f32
    %181 = vector.broadcast %cst_87 : f32 to vector<8x128xf32>
    %182 = arith.mulf %181, %179 : vector<8x128xf32>
    %cst_88 = arith.constant 0.707106769 : f32
    %183 = vector.broadcast %cst_88 : f32 to vector<8x128xf32>
    %184 = arith.mulf %179, %183 : vector<8x128xf32>
    %185 = math.erf %184 : vector<8x128xf32>
    %cst_89 = arith.constant 1.000000e+00 : f32
    %186 = vector.broadcast %cst_89 : f32 to vector<8x128xf32>
    %187 = arith.addf %186, %185 : vector<8x128xf32>
    %188 = arith.mulf %182, %187 : vector<8x128xf32>
    %189 = vector.broadcast %180 : f32 to vector<8x128xf32>
    %190 = arith.mulf %189, %188 : vector<8x128xf32>
    %191 = arith.addf %172, %190 : vector<8x128xf32>
    %c0_90 = arith.constant 0 : index
    %c0_91 = arith.constant 0 : index
    %c10 = arith.constant 10 : index
    %192 = vector.load %arg3[%c0_90, %c0_91, %c10] : memref<1x8x32xf32, #tpu.memory_space<vmem>>, vector<1x8x1xf32>
    %193 = vector.shape_cast %192 : vector<1x8x1xf32> to vector<8x1xf32>
    %c0_92 = arith.constant 0 : index
    %c10_93 = arith.constant 10 : index
    %c0_94 = arith.constant 0 : index
    %194 = vector.load %arg4[%c0_92, %c10_93, %c0_94] : memref<1x32x128xf32, #tpu.memory_space<vmem>>, vector<1x1x128xf32>
    %195 = vector.shape_cast %194 : vector<1x1x128xf32> to vector<1x128xf32>
    %196 = vector.broadcast %193 : vector<8x1xf32> to vector<8x128xf32>
    %197 = vector.broadcast %195 : vector<1x128xf32> to vector<8x128xf32>
    %198 = arith.addf %196, %197 : vector<8x128xf32>
    %c10_95 = arith.constant 10 : index
    %199 = memref.load %arg5[%c10_95] : memref<32xf32, #tpu.memory_space<smem>>
    %cst_96 = arith.constant 5.000000e-01 : f32
    %200 = vector.broadcast %cst_96 : f32 to vector<8x128xf32>
    %201 = arith.mulf %200, %198 : vector<8x128xf32>
    %cst_97 = arith.constant 0.707106769 : f32
    %202 = vector.broadcast %cst_97 : f32 to vector<8x128xf32>
    %203 = arith.mulf %198, %202 : vector<8x128xf32>
    %204 = math.erf %203 : vector<8x128xf32>
    %cst_98 = arith.constant 1.000000e+00 : f32
    %205 = vector.broadcast %cst_98 : f32 to vector<8x128xf32>
    %206 = arith.addf %205, %204 : vector<8x128xf32>
    %207 = arith.mulf %201, %206 : vector<8x128xf32>
    %208 = vector.broadcast %199 : f32 to vector<8x128xf32>
    %209 = arith.mulf %208, %207 : vector<8x128xf32>
    %210 = arith.addf %191, %209 : vector<8x128xf32>
    %c0_99 = arith.constant 0 : index
    %c0_100 = arith.constant 0 : index
    %c11 = arith.constant 11 : index
    %211 = vector.load %arg3[%c0_99, %c0_100, %c11] : memref<1x8x32xf32, #tpu.memory_space<vmem>>, vector<1x8x1xf32>
    %212 = vector.shape_cast %211 : vector<1x8x1xf32> to vector<8x1xf32>
    %c0_101 = arith.constant 0 : index
    %c11_102 = arith.constant 11 : index
    %c0_103 = arith.constant 0 : index
    %213 = vector.load %arg4[%c0_101, %c11_102, %c0_103] : memref<1x32x128xf32, #tpu.memory_space<vmem>>, vector<1x1x128xf32>
    %214 = vector.shape_cast %213 : vector<1x1x128xf32> to vector<1x128xf32>
    %215 = vector.broadcast %212 : vector<8x1xf32> to vector<8x128xf32>
    %216 = vector.broadcast %214 : vector<1x128xf32> to vector<8x128xf32>
    %217 = arith.addf %215, %216 : vector<8x128xf32>
    %c11_104 = arith.constant 11 : index
    %218 = memref.load %arg5[%c11_104] : memref<32xf32, #tpu.memory_space<smem>>
    %cst_105 = arith.constant 5.000000e-01 : f32
    %219 = vector.broadcast %cst_105 : f32 to vector<8x128xf32>
    %220 = arith.mulf %219, %217 : vector<8x128xf32>
    %cst_106 = arith.constant 0.707106769 : f32
    %221 = vector.broadcast %cst_106 : f32 to vector<8x128xf32>
    %222 = arith.mulf %217, %221 : vector<8x128xf32>
    %223 = math.erf %222 : vector<8x128xf32>
    %cst_107 = arith.constant 1.000000e+00 : f32
    %224 = vector.broadcast %cst_107 : f32 to vector<8x128xf32>
    %225 = arith.addf %224, %223 : vector<8x128xf32>
    %226 = arith.mulf %220, %225 : vector<8x128xf32>
    %227 = vector.broadcast %218 : f32 to vector<8x128xf32>
    %228 = arith.mulf %227, %226 : vector<8x128xf32>
    %229 = arith.addf %210, %228 : vector<8x128xf32>
    %c0_108 = arith.constant 0 : index
    %c0_109 = arith.constant 0 : index
    %c12 = arith.constant 12 : index
    %230 = vector.load %arg3[%c0_108, %c0_109, %c12] : memref<1x8x32xf32, #tpu.memory_space<vmem>>, vector<1x8x1xf32>
    %231 = vector.shape_cast %230 : vector<1x8x1xf32> to vector<8x1xf32>
    %c0_110 = arith.constant 0 : index
    %c12_111 = arith.constant 12 : index
    %c0_112 = arith.constant 0 : index
    %232 = vector.load %arg4[%c0_110, %c12_111, %c0_112] : memref<1x32x128xf32, #tpu.memory_space<vmem>>, vector<1x1x128xf32>
    %233 = vector.shape_cast %232 : vector<1x1x128xf32> to vector<1x128xf32>
    %234 = vector.broadcast %231 : vector<8x1xf32> to vector<8x128xf32>
    %235 = vector.broadcast %233 : vector<1x128xf32> to vector<8x128xf32>
    %236 = arith.addf %234, %235 : vector<8x128xf32>
    %c12_113 = arith.constant 12 : index
    %237 = memref.load %arg5[%c12_113] : memref<32xf32, #tpu.memory_space<smem>>
    %cst_114 = arith.constant 5.000000e-01 : f32
    %238 = vector.broadcast %cst_114 : f32 to vector<8x128xf32>
    %239 = arith.mulf %238, %236 : vector<8x128xf32>
    %cst_115 = arith.constant 0.707106769 : f32
    %240 = vector.broadcast %cst_115 : f32 to vector<8x128xf32>
    %241 = arith.mulf %236, %240 : vector<8x128xf32>
    %242 = math.erf %241 : vector<8x128xf32>
    %cst_116 = arith.constant 1.000000e+00 : f32
    %243 = vector.broadcast %cst_116 : f32 to vector<8x128xf32>
    %244 = arith.addf %243, %242 : vector<8x128xf32>
    %245 = arith.mulf %239, %244 : vector<8x128xf32>
    %246 = vector.broadcast %237 : f32 to vector<8x128xf32>
    %247 = arith.mulf %246, %245 : vector<8x128xf32>
    %248 = arith.addf %229, %247 : vector<8x128xf32>
    %c0_117 = arith.constant 0 : index
    %c0_118 = arith.constant 0 : index
    %c13 = arith.constant 13 : index
    %249 = vector.load %arg3[%c0_117, %c0_118, %c13] : memref<1x8x32xf32, #tpu.memory_space<vmem>>, vector<1x8x1xf32>
    %250 = vector.shape_cast %249 : vector<1x8x1xf32> to vector<8x1xf32>
    %c0_119 = arith.constant 0 : index
    %c13_120 = arith.constant 13 : index
    %c0_121 = arith.constant 0 : index
    %251 = vector.load %arg4[%c0_119, %c13_120, %c0_121] : memref<1x32x128xf32, #tpu.memory_space<vmem>>, vector<1x1x128xf32>
    %252 = vector.shape_cast %251 : vector<1x1x128xf32> to vector<1x128xf32>
    %253 = vector.broadcast %250 : vector<8x1xf32> to vector<8x128xf32>
    %254 = vector.broadcast %252 : vector<1x128xf32> to vector<8x128xf32>
    %255 = arith.addf %253, %254 : vector<8x128xf32>
    %c13_122 = arith.constant 13 : index
    %256 = memref.load %arg5[%c13_122] : memref<32xf32, #tpu.memory_space<smem>>
    %cst_123 = arith.constant 5.000000e-01 : f32
    %257 = vector.broadcast %cst_123 : f32 to vector<8x128xf32>
    %258 = arith.mulf %257, %255 : vector<8x128xf32>
    %cst_124 = arith.constant 0.707106769 : f32
    %259 = vector.broadcast %cst_124 : f32 to vector<8x128xf32>
    %260 = arith.mulf %255, %259 : vector<8x128xf32>
    %261 = math.erf %260 : vector<8x128xf32>
    %cst_125 = arith.constant 1.000000e+00 : f32
    %262 = vector.broadcast %cst_125 : f32 to vector<8x128xf32>
    %263 = arith.addf %262, %261 : vector<8x128xf32>
    %264 = arith.mulf %258, %263 : vector<8x128xf32>
    %265 = vector.broadcast %256 : f32 to vector<8x128xf32>
    %266 = arith.mulf %265, %264 : vector<8x128xf32>
    %267 = arith.addf %248, %266 : vector<8x128xf32>
    %c0_126 = arith.constant 0 : index
    %c0_127 = arith.constant 0 : index
    %c14 = arith.constant 14 : index
    %268 = vector.load %arg3[%c0_126, %c0_127, %c14] : memref<1x8x32xf32, #tpu.memory_space<vmem>>, vector<1x8x1xf32>
    %269 = vector.shape_cast %268 : vector<1x8x1xf32> to vector<8x1xf32>
    %c0_128 = arith.constant 0 : index
    %c14_129 = arith.constant 14 : index
    %c0_130 = arith.constant 0 : index
    %270 = vector.load %arg4[%c0_128, %c14_129, %c0_130] : memref<1x32x128xf32, #tpu.memory_space<vmem>>, vector<1x1x128xf32>
    %271 = vector.shape_cast %270 : vector<1x1x128xf32> to vector<1x128xf32>
    %272 = vector.broadcast %269 : vector<8x1xf32> to vector<8x128xf32>
    %273 = vector.broadcast %271 : vector<1x128xf32> to vector<8x128xf32>
    %274 = arith.addf %272, %273 : vector<8x128xf32>
    %c14_131 = arith.constant 14 : index
    %275 = memref.load %arg5[%c14_131] : memref<32xf32, #tpu.memory_space<smem>>
    %cst_132 = arith.constant 5.000000e-01 : f32
    %276 = vector.broadcast %cst_132 : f32 to vector<8x128xf32>
    %277 = arith.mulf %276, %274 : vector<8x128xf32>
    %cst_133 = arith.constant 0.707106769 : f32
    %278 = vector.broadcast %cst_133 : f32 to vector<8x128xf32>
    %279 = arith.mulf %274, %278 : vector<8x128xf32>
    %280 = math.erf %279 : vector<8x128xf32>
    %cst_134 = arith.constant 1.000000e+00 : f32
    %281 = vector.broadcast %cst_134 : f32 to vector<8x128xf32>
    %282 = arith.addf %281, %280 : vector<8x128xf32>
    %283 = arith.mulf %277, %282 : vector<8x128xf32>
    %284 = vector.broadcast %275 : f32 to vector<8x128xf32>
    %285 = arith.mulf %284, %283 : vector<8x128xf32>
    %286 = arith.addf %267, %285 : vector<8x128xf32>
    %c0_135 = arith.constant 0 : index
    %c0_136 = arith.constant 0 : index
    %c15 = arith.constant 15 : index
    %287 = vector.load %arg3[%c0_135, %c0_136, %c15] : memref<1x8x32xf32, #tpu.memory_space<vmem>>, vector<1x8x1xf32>
    %288 = vector.shape_cast %287 : vector<1x8x1xf32> to vector<8x1xf32>
    %c0_137 = arith.constant 0 : index
    %c15_138 = arith.constant 15 : index
    %c0_139 = arith.constant 0 : index
    %289 = vector.load %arg4[%c0_137, %c15_138, %c0_139] : memref<1x32x128xf32, #tpu.memory_space<vmem>>, vector<1x1x128xf32>
    %290 = vector.shape_cast %289 : vector<1x1x128xf32> to vector<1x128xf32>
    %291 = vector.broadcast %288 : vector<8x1xf32> to vector<8x128xf32>
    %292 = vector.broadcast %290 : vector<1x128xf32> to vector<8x128xf32>
    %293 = arith.addf %291, %292 : vector<8x128xf32>
    %c15_140 = arith.constant 15 : index
    %294 = memref.load %arg5[%c15_140] : memref<32xf32, #tpu.memory_space<smem>>
    %cst_141 = arith.constant 5.000000e-01 : f32
    %295 = vector.broadcast %cst_141 : f32 to vector<8x128xf32>
    %296 = arith.mulf %295, %293 : vector<8x128xf32>
    %cst_142 = arith.constant 0.707106769 : f32
    %297 = vector.broadcast %cst_142 : f32 to vector<8x128xf32>
    %298 = arith.mulf %293, %297 : vector<8x128xf32>
    %299 = math.erf %298 : vector<8x128xf32>
    %cst_143 = arith.constant 1.000000e+00 : f32
    %300 = vector.broadcast %cst_143 : f32 to vector<8x128xf32>
    %301 = arith.addf %300, %299 : vector<8x128xf32>
    %302 = arith.mulf %296, %301 : vector<8x128xf32>
    %303 = vector.broadcast %294 : f32 to vector<8x128xf32>
    %304 = arith.mulf %303, %302 : vector<8x128xf32>
    %305 = arith.addf %286, %304 : vector<8x128xf32>
    %c0_144 = arith.constant 0 : index
    %c0_145 = arith.constant 0 : index
    %c16 = arith.constant 16 : index
    %306 = vector.load %arg3[%c0_144, %c0_145, %c16] : memref<1x8x32xf32, #tpu.memory_space<vmem>>, vector<1x8x1xf32>
    %307 = vector.shape_cast %306 : vector<1x8x1xf32> to vector<8x1xf32>
    %c0_146 = arith.constant 0 : index
    %c16_147 = arith.constant 16 : index
    %c0_148 = arith.constant 0 : index
    %308 = vector.load %arg4[%c0_146, %c16_147, %c0_148] : memref<1x32x128xf32, #tpu.memory_space<vmem>>, vector<1x1x128xf32>
    %309 = vector.shape_cast %308 : vector<1x1x128xf32> to vector<1x128xf32>
    %310 = vector.broadcast %307 : vector<8x1xf32> to vector<8x128xf32>
    %311 = vector.broadcast %309 : vector<1x128xf32> to vector<8x128xf32>
    %312 = arith.addf %310, %311 : vector<8x128xf32>
    %c16_149 = arith.constant 16 : index
    %313 = memref.load %arg5[%c16_149] : memref<32xf32, #tpu.memory_space<smem>>
    %cst_150 = arith.constant 5.000000e-01 : f32
    %314 = vector.broadcast %cst_150 : f32 to vector<8x128xf32>
    %315 = arith.mulf %314, %312 : vector<8x128xf32>
    %cst_151 = arith.constant 0.707106769 : f32
    %316 = vector.broadcast %cst_151 : f32 to vector<8x128xf32>
    %317 = arith.mulf %312, %316 : vector<8x128xf32>
    %318 = math.erf %317 : vector<8x128xf32>
    %cst_152 = arith.constant 1.000000e+00 : f32
    %319 = vector.broadcast %cst_152 : f32 to vector<8x128xf32>
    %320 = arith.addf %319, %318 : vector<8x128xf32>
    %321 = arith.mulf %315, %320 : vector<8x128xf32>
    %322 = vector.broadcast %313 : f32 to vector<8x128xf32>
    %323 = arith.mulf %322, %321 : vector<8x128xf32>
    %324 = arith.addf %305, %323 : vector<8x128xf32>
    %c0_153 = arith.constant 0 : index
    %c0_154 = arith.constant 0 : index
    %c17 = arith.constant 17 : index
    %325 = vector.load %arg3[%c0_153, %c0_154, %c17] : memref<1x8x32xf32, #tpu.memory_space<vmem>>, vector<1x8x1xf32>
    %326 = vector.shape_cast %325 : vector<1x8x1xf32> to vector<8x1xf32>
    %c0_155 = arith.constant 0 : index
    %c17_156 = arith.constant 17 : index
    %c0_157 = arith.constant 0 : index
    %327 = vector.load %arg4[%c0_155, %c17_156, %c0_157] : memref<1x32x128xf32, #tpu.memory_space<vmem>>, vector<1x1x128xf32>
    %328 = vector.shape_cast %327 : vector<1x1x128xf32> to vector<1x128xf32>
    %329 = vector.broadcast %326 : vector<8x1xf32> to vector<8x128xf32>
    %330 = vector.broadcast %328 : vector<1x128xf32> to vector<8x128xf32>
    %331 = arith.addf %329, %330 : vector<8x128xf32>
    %c17_158 = arith.constant 17 : index
    %332 = memref.load %arg5[%c17_158] : memref<32xf32, #tpu.memory_space<smem>>
    %cst_159 = arith.constant 5.000000e-01 : f32
    %333 = vector.broadcast %cst_159 : f32 to vector<8x128xf32>
    %334 = arith.mulf %333, %331 : vector<8x128xf32>
    %cst_160 = arith.constant 0.707106769 : f32
    %335 = vector.broadcast %cst_160 : f32 to vector<8x128xf32>
    %336 = arith.mulf %331, %335 : vector<8x128xf32>
    %337 = math.erf %336 : vector<8x128xf32>
    %cst_161 = arith.constant 1.000000e+00 : f32
    %338 = vector.broadcast %cst_161 : f32 to vector<8x128xf32>
    %339 = arith.addf %338, %337 : vector<8x128xf32>
    %340 = arith.mulf %334, %339 : vector<8x128xf32>
    %341 = vector.broadcast %332 : f32 to vector<8x128xf32>
    %342 = arith.mulf %341, %340 : vector<8x128xf32>
    %343 = arith.addf %324, %342 : vector<8x128xf32>
    %c0_162 = arith.constant 0 : index
    %c0_163 = arith.constant 0 : index
    %c18 = arith.constant 18 : index
    %344 = vector.load %arg3[%c0_162, %c0_163, %c18] : memref<1x8x32xf32, #tpu.memory_space<vmem>>, vector<1x8x1xf32>
    %345 = vector.shape_cast %344 : vector<1x8x1xf32> to vector<8x1xf32>
    %c0_164 = arith.constant 0 : index
    %c18_165 = arith.constant 18 : index
    %c0_166 = arith.constant 0 : index
    %346 = vector.load %arg4[%c0_164, %c18_165, %c0_166] : memref<1x32x128xf32, #tpu.memory_space<vmem>>, vector<1x1x128xf32>
    %347 = vector.shape_cast %346 : vector<1x1x128xf32> to vector<1x128xf32>
    %348 = vector.broadcast %345 : vector<8x1xf32> to vector<8x128xf32>
    %349 = vector.broadcast %347 : vector<1x128xf32> to vector<8x128xf32>
    %350 = arith.addf %348, %349 : vector<8x128xf32>
    %c18_167 = arith.constant 18 : index
    %351 = memref.load %arg5[%c18_167] : memref<32xf32, #tpu.memory_space<smem>>
    %cst_168 = arith.constant 5.000000e-01 : f32
    %352 = vector.broadcast %cst_168 : f32 to vector<8x128xf32>
    %353 = arith.mulf %352, %350 : vector<8x128xf32>
    %cst_169 = arith.constant 0.707106769 : f32
    %354 = vector.broadcast %cst_169 : f32 to vector<8x128xf32>
    %355 = arith.mulf %350, %354 : vector<8x128xf32>
    %356 = math.erf %355 : vector<8x128xf32>
    %cst_170 = arith.constant 1.000000e+00 : f32
    %357 = vector.broadcast %cst_170 : f32 to vector<8x128xf32>
    %358 = arith.addf %357, %356 : vector<8x128xf32>
    %359 = arith.mulf %353, %358 : vector<8x128xf32>
    %360 = vector.broadcast %351 : f32 to vector<8x128xf32>
    %361 = arith.mulf %360, %359 : vector<8x128xf32>
    %362 = arith.addf %343, %361 : vector<8x128xf32>
    %c0_171 = arith.constant 0 : index
    %c0_172 = arith.constant 0 : index
    %c19 = arith.constant 19 : index
    %363 = vector.load %arg3[%c0_171, %c0_172, %c19] : memref<1x8x32xf32, #tpu.memory_space<vmem>>, vector<1x8x1xf32>
    %364 = vector.shape_cast %363 : vector<1x8x1xf32> to vector<8x1xf32>
    %c0_173 = arith.constant 0 : index
    %c19_174 = arith.constant 19 : index
    %c0_175 = arith.constant 0 : index
    %365 = vector.load %arg4[%c0_173, %c19_174, %c0_175] : memref<1x32x128xf32, #tpu.memory_space<vmem>>, vector<1x1x128xf32>
    %366 = vector.shape_cast %365 : vector<1x1x128xf32> to vector<1x128xf32>
    %367 = vector.broadcast %364 : vector<8x1xf32> to vector<8x128xf32>
    %368 = vector.broadcast %366 : vector<1x128xf32> to vector<8x128xf32>
    %369 = arith.addf %367, %368 : vector<8x128xf32>
    %c19_176 = arith.constant 19 : index
    %370 = memref.load %arg5[%c19_176] : memref<32xf32, #tpu.memory_space<smem>>
    %cst_177 = arith.constant 5.000000e-01 : f32
    %371 = vector.broadcast %cst_177 : f32 to vector<8x128xf32>
    %372 = arith.mulf %371, %369 : vector<8x128xf32>
    %cst_178 = arith.constant 0.707106769 : f32
    %373 = vector.broadcast %cst_178 : f32 to vector<8x128xf32>
    %374 = arith.mulf %369, %373 : vector<8x128xf32>
    %375 = math.erf %374 : vector<8x128xf32>
    %cst_179 = arith.constant 1.000000e+00 : f32
    %376 = vector.broadcast %cst_179 : f32 to vector<8x128xf32>
    %377 = arith.addf %376, %375 : vector<8x128xf32>
    %378 = arith.mulf %372, %377 : vector<8x128xf32>
    %379 = vector.broadcast %370 : f32 to vector<8x128xf32>
    %380 = arith.mulf %379, %378 : vector<8x128xf32>
    %381 = arith.addf %362, %380 : vector<8x128xf32>
    %c0_180 = arith.constant 0 : index
    %c0_181 = arith.constant 0 : index
    %c20 = arith.constant 20 : index
    %382 = vector.load %arg3[%c0_180, %c0_181, %c20] : memref<1x8x32xf32, #tpu.memory_space<vmem>>, vector<1x8x1xf32>
    %383 = vector.shape_cast %382 : vector<1x8x1xf32> to vector<8x1xf32>
    %c0_182 = arith.constant 0 : index
    %c20_183 = arith.constant 20 : index
    %c0_184 = arith.constant 0 : index
    %384 = vector.load %arg4[%c0_182, %c20_183, %c0_184] : memref<1x32x128xf32, #tpu.memory_space<vmem>>, vector<1x1x128xf32>
    %385 = vector.shape_cast %384 : vector<1x1x128xf32> to vector<1x128xf32>
    %386 = vector.broadcast %383 : vector<8x1xf32> to vector<8x128xf32>
    %387 = vector.broadcast %385 : vector<1x128xf32> to vector<8x128xf32>
    %388 = arith.addf %386, %387 : vector<8x128xf32>
    %c20_185 = arith.constant 20 : index
    %389 = memref.load %arg5[%c20_185] : memref<32xf32, #tpu.memory_space<smem>>
    %cst_186 = arith.constant 5.000000e-01 : f32
    %390 = vector.broadcast %cst_186 : f32 to vector<8x128xf32>
    %391 = arith.mulf %390, %388 : vector<8x128xf32>
    %cst_187 = arith.constant 0.707106769 : f32
    %392 = vector.broadcast %cst_187 : f32 to vector<8x128xf32>
    %393 = arith.mulf %388, %392 : vector<8x128xf32>
    %394 = math.erf %393 : vector<8x128xf32>
    %cst_188 = arith.constant 1.000000e+00 : f32
    %395 = vector.broadcast %cst_188 : f32 to vector<8x128xf32>
    %396 = arith.addf %395, %394 : vector<8x128xf32>
    %397 = arith.mulf %391, %396 : vector<8x128xf32>
    %398 = vector.broadcast %389 : f32 to vector<8x128xf32>
    %399 = arith.mulf %398, %397 : vector<8x128xf32>
    %400 = arith.addf %381, %399 : vector<8x128xf32>
    %c0_189 = arith.constant 0 : index
    %c0_190 = arith.constant 0 : index
    %c21 = arith.constant 21 : index
    %401 = vector.load %arg3[%c0_189, %c0_190, %c21] : memref<1x8x32xf32, #tpu.memory_space<vmem>>, vector<1x8x1xf32>
    %402 = vector.shape_cast %401 : vector<1x8x1xf32> to vector<8x1xf32>
    %c0_191 = arith.constant 0 : index
    %c21_192 = arith.constant 21 : index
    %c0_193 = arith.constant 0 : index
    %403 = vector.load %arg4[%c0_191, %c21_192, %c0_193] : memref<1x32x128xf32, #tpu.memory_space<vmem>>, vector<1x1x128xf32>
    %404 = vector.shape_cast %403 : vector<1x1x128xf32> to vector<1x128xf32>
    %405 = vector.broadcast %402 : vector<8x1xf32> to vector<8x128xf32>
    %406 = vector.broadcast %404 : vector<1x128xf32> to vector<8x128xf32>
    %407 = arith.addf %405, %406 : vector<8x128xf32>
    %c21_194 = arith.constant 21 : index
    %408 = memref.load %arg5[%c21_194] : memref<32xf32, #tpu.memory_space<smem>>
    %cst_195 = arith.constant 5.000000e-01 : f32
    %409 = vector.broadcast %cst_195 : f32 to vector<8x128xf32>
    %410 = arith.mulf %409, %407 : vector<8x128xf32>
    %cst_196 = arith.constant 0.707106769 : f32
    %411 = vector.broadcast %cst_196 : f32 to vector<8x128xf32>
    %412 = arith.mulf %407, %411 : vector<8x128xf32>
    %413 = math.erf %412 : vector<8x128xf32>
    %cst_197 = arith.constant 1.000000e+00 : f32
    %414 = vector.broadcast %cst_197 : f32 to vector<8x128xf32>
    %415 = arith.addf %414, %413 : vector<8x128xf32>
    %416 = arith.mulf %410, %415 : vector<8x128xf32>
    %417 = vector.broadcast %408 : f32 to vector<8x128xf32>
    %418 = arith.mulf %417, %416 : vector<8x128xf32>
    %419 = arith.addf %400, %418 : vector<8x128xf32>
    %c0_198 = arith.constant 0 : index
    %c0_199 = arith.constant 0 : index
    %c22 = arith.constant 22 : index
    %420 = vector.load %arg3[%c0_198, %c0_199, %c22] : memref<1x8x32xf32, #tpu.memory_space<vmem>>, vector<1x8x1xf32>
    %421 = vector.shape_cast %420 : vector<1x8x1xf32> to vector<8x1xf32>
    %c0_200 = arith.constant 0 : index
    %c22_201 = arith.constant 22 : index
    %c0_202 = arith.constant 0 : index
    %422 = vector.load %arg4[%c0_200, %c22_201, %c0_202] : memref<1x32x128xf32, #tpu.memory_space<vmem>>, vector<1x1x128xf32>
    %423 = vector.shape_cast %422 : vector<1x1x128xf32> to vector<1x128xf32>
    %424 = vector.broadcast %421 : vector<8x1xf32> to vector<8x128xf32>
    %425 = vector.broadcast %423 : vector<1x128xf32> to vector<8x128xf32>
    %426 = arith.addf %424, %425 : vector<8x128xf32>
    %c22_203 = arith.constant 22 : index
    %427 = memref.load %arg5[%c22_203] : memref<32xf32, #tpu.memory_space<smem>>
    %cst_204 = arith.constant 5.000000e-01 : f32
    %428 = vector.broadcast %cst_204 : f32 to vector<8x128xf32>
    %429 = arith.mulf %428, %426 : vector<8x128xf32>
    %cst_205 = arith.constant 0.707106769 : f32
    %430 = vector.broadcast %cst_205 : f32 to vector<8x128xf32>
    %431 = arith.mulf %426, %430 : vector<8x128xf32>
    %432 = math.erf %431 : vector<8x128xf32>
    %cst_206 = arith.constant 1.000000e+00 : f32
    %433 = vector.broadcast %cst_206 : f32 to vector<8x128xf32>
    %434 = arith.addf %433, %432 : vector<8x128xf32>
    %435 = arith.mulf %429, %434 : vector<8x128xf32>
    %436 = vector.broadcast %427 : f32 to vector<8x128xf32>
    %437 = arith.mulf %436, %435 : vector<8x128xf32>
    %438 = arith.addf %419, %437 : vector<8x128xf32>
    %c0_207 = arith.constant 0 : index
    %c0_208 = arith.constant 0 : index
    %c23 = arith.constant 23 : index
    %439 = vector.load %arg3[%c0_207, %c0_208, %c23] : memref<1x8x32xf32, #tpu.memory_space<vmem>>, vector<1x8x1xf32>
    %440 = vector.shape_cast %439 : vector<1x8x1xf32> to vector<8x1xf32>
    %c0_209 = arith.constant 0 : index
    %c23_210 = arith.constant 23 : index
    %c0_211 = arith.constant 0 : index
    %441 = vector.load %arg4[%c0_209, %c23_210, %c0_211] : memref<1x32x128xf32, #tpu.memory_space<vmem>>, vector<1x1x128xf32>
    %442 = vector.shape_cast %441 : vector<1x1x128xf32> to vector<1x128xf32>
    %443 = vector.broadcast %440 : vector<8x1xf32> to vector<8x128xf32>
    %444 = vector.broadcast %442 : vector<1x128xf32> to vector<8x128xf32>
    %445 = arith.addf %443, %444 : vector<8x128xf32>
    %c23_212 = arith.constant 23 : index
    %446 = memref.load %arg5[%c23_212] : memref<32xf32, #tpu.memory_space<smem>>
    %cst_213 = arith.constant 5.000000e-01 : f32
    %447 = vector.broadcast %cst_213 : f32 to vector<8x128xf32>
    %448 = arith.mulf %447, %445 : vector<8x128xf32>
    %cst_214 = arith.constant 0.707106769 : f32
    %449 = vector.broadcast %cst_214 : f32 to vector<8x128xf32>
    %450 = arith.mulf %445, %449 : vector<8x128xf32>
    %451 = math.erf %450 : vector<8x128xf32>
    %cst_215 = arith.constant 1.000000e+00 : f32
    %452 = vector.broadcast %cst_215 : f32 to vector<8x128xf32>
    %453 = arith.addf %452, %451 : vector<8x128xf32>
    %454 = arith.mulf %448, %453 : vector<8x128xf32>
    %455 = vector.broadcast %446 : f32 to vector<8x128xf32>
    %456 = arith.mulf %455, %454 : vector<8x128xf32>
    %457 = arith.addf %438, %456 : vector<8x128xf32>
    %c0_216 = arith.constant 0 : index
    %c0_217 = arith.constant 0 : index
    %c24 = arith.constant 24 : index
    %458 = vector.load %arg3[%c0_216, %c0_217, %c24] : memref<1x8x32xf32, #tpu.memory_space<vmem>>, vector<1x8x1xf32>
    %459 = vector.shape_cast %458 : vector<1x8x1xf32> to vector<8x1xf32>
    %c0_218 = arith.constant 0 : index
    %c24_219 = arith.constant 24 : index
    %c0_220 = arith.constant 0 : index
    %460 = vector.load %arg4[%c0_218, %c24_219, %c0_220] : memref<1x32x128xf32, #tpu.memory_space<vmem>>, vector<1x1x128xf32>
    %461 = vector.shape_cast %460 : vector<1x1x128xf32> to vector<1x128xf32>
    %462 = vector.broadcast %459 : vector<8x1xf32> to vector<8x128xf32>
    %463 = vector.broadcast %461 : vector<1x128xf32> to vector<8x128xf32>
    %464 = arith.addf %462, %463 : vector<8x128xf32>
    %c24_221 = arith.constant 24 : index
    %465 = memref.load %arg5[%c24_221] : memref<32xf32, #tpu.memory_space<smem>>
    %cst_222 = arith.constant 5.000000e-01 : f32
    %466 = vector.broadcast %cst_222 : f32 to vector<8x128xf32>
    %467 = arith.mulf %466, %464 : vector<8x128xf32>
    %cst_223 = arith.constant 0.707106769 : f32
    %468 = vector.broadcast %cst_223 : f32 to vector<8x128xf32>
    %469 = arith.mulf %464, %468 : vector<8x128xf32>
    %470 = math.erf %469 : vector<8x128xf32>
    %cst_224 = arith.constant 1.000000e+00 : f32
    %471 = vector.broadcast %cst_224 : f32 to vector<8x128xf32>
    %472 = arith.addf %471, %470 : vector<8x128xf32>
    %473 = arith.mulf %467, %472 : vector<8x128xf32>
    %474 = vector.broadcast %465 : f32 to vector<8x128xf32>
    %475 = arith.mulf %474, %473 : vector<8x128xf32>
    %476 = arith.addf %457, %475 : vector<8x128xf32>
    %c0_225 = arith.constant 0 : index
    %c0_226 = arith.constant 0 : index
    %c25 = arith.constant 25 : index
    %477 = vector.load %arg3[%c0_225, %c0_226, %c25] : memref<1x8x32xf32, #tpu.memory_space<vmem>>, vector<1x8x1xf32>
    %478 = vector.shape_cast %477 : vector<1x8x1xf32> to vector<8x1xf32>
    %c0_227 = arith.constant 0 : index
    %c25_228 = arith.constant 25 : index
    %c0_229 = arith.constant 0 : index
    %479 = vector.load %arg4[%c0_227, %c25_228, %c0_229] : memref<1x32x128xf32, #tpu.memory_space<vmem>>, vector<1x1x128xf32>
    %480 = vector.shape_cast %479 : vector<1x1x128xf32> to vector<1x128xf32>
    %481 = vector.broadcast %478 : vector<8x1xf32> to vector<8x128xf32>
    %482 = vector.broadcast %480 : vector<1x128xf32> to vector<8x128xf32>
    %483 = arith.addf %481, %482 : vector<8x128xf32>
    %c25_230 = arith.constant 25 : index
    %484 = memref.load %arg5[%c25_230] : memref<32xf32, #tpu.memory_space<smem>>
    %cst_231 = arith.constant 5.000000e-01 : f32
    %485 = vector.broadcast %cst_231 : f32 to vector<8x128xf32>
    %486 = arith.mulf %485, %483 : vector<8x128xf32>
    %cst_232 = arith.constant 0.707106769 : f32
    %487 = vector.broadcast %cst_232 : f32 to vector<8x128xf32>
    %488 = arith.mulf %483, %487 : vector<8x128xf32>
    %489 = math.erf %488 : vector<8x128xf32>
    %cst_233 = arith.constant 1.000000e+00 : f32
    %490 = vector.broadcast %cst_233 : f32 to vector<8x128xf32>
    %491 = arith.addf %490, %489 : vector<8x128xf32>
    %492 = arith.mulf %486, %491 : vector<8x128xf32>
    %493 = vector.broadcast %484 : f32 to vector<8x128xf32>
    %494 = arith.mulf %493, %492 : vector<8x128xf32>
    %495 = arith.addf %476, %494 : vector<8x128xf32>
    %c0_234 = arith.constant 0 : index
    %c0_235 = arith.constant 0 : index
    %c26 = arith.constant 26 : index
    %496 = vector.load %arg3[%c0_234, %c0_235, %c26] : memref<1x8x32xf32, #tpu.memory_space<vmem>>, vector<1x8x1xf32>
    %497 = vector.shape_cast %496 : vector<1x8x1xf32> to vector<8x1xf32>
    %c0_236 = arith.constant 0 : index
    %c26_237 = arith.constant 26 : index
    %c0_238 = arith.constant 0 : index
    %498 = vector.load %arg4[%c0_236, %c26_237, %c0_238] : memref<1x32x128xf32, #tpu.memory_space<vmem>>, vector<1x1x128xf32>
    %499 = vector.shape_cast %498 : vector<1x1x128xf32> to vector<1x128xf32>
    %500 = vector.broadcast %497 : vector<8x1xf32> to vector<8x128xf32>
    %501 = vector.broadcast %499 : vector<1x128xf32> to vector<8x128xf32>
    %502 = arith.addf %500, %501 : vector<8x128xf32>
    %c26_239 = arith.constant 26 : index
    %503 = memref.load %arg5[%c26_239] : memref<32xf32, #tpu.memory_space<smem>>
    %cst_240 = arith.constant 5.000000e-01 : f32
    %504 = vector.broadcast %cst_240 : f32 to vector<8x128xf32>
    %505 = arith.mulf %504, %502 : vector<8x128xf32>
    %cst_241 = arith.constant 0.707106769 : f32
    %506 = vector.broadcast %cst_241 : f32 to vector<8x128xf32>
    %507 = arith.mulf %502, %506 : vector<8x128xf32>
    %508 = math.erf %507 : vector<8x128xf32>
    %cst_242 = arith.constant 1.000000e+00 : f32
    %509 = vector.broadcast %cst_242 : f32 to vector<8x128xf32>
    %510 = arith.addf %509, %508 : vector<8x128xf32>
    %511 = arith.mulf %505, %510 : vector<8x128xf32>
    %512 = vector.broadcast %503 : f32 to vector<8x128xf32>
    %513 = arith.mulf %512, %511 : vector<8x128xf32>
    %514 = arith.addf %495, %513 : vector<8x128xf32>
    %c0_243 = arith.constant 0 : index
    %c0_244 = arith.constant 0 : index
    %c27 = arith.constant 27 : index
    %515 = vector.load %arg3[%c0_243, %c0_244, %c27] : memref<1x8x32xf32, #tpu.memory_space<vmem>>, vector<1x8x1xf32>
    %516 = vector.shape_cast %515 : vector<1x8x1xf32> to vector<8x1xf32>
    %c0_245 = arith.constant 0 : index
    %c27_246 = arith.constant 27 : index
    %c0_247 = arith.constant 0 : index
    %517 = vector.load %arg4[%c0_245, %c27_246, %c0_247] : memref<1x32x128xf32, #tpu.memory_space<vmem>>, vector<1x1x128xf32>
    %518 = vector.shape_cast %517 : vector<1x1x128xf32> to vector<1x128xf32>
    %519 = vector.broadcast %516 : vector<8x1xf32> to vector<8x128xf32>
    %520 = vector.broadcast %518 : vector<1x128xf32> to vector<8x128xf32>
    %521 = arith.addf %519, %520 : vector<8x128xf32>
    %c27_248 = arith.constant 27 : index
    %522 = memref.load %arg5[%c27_248] : memref<32xf32, #tpu.memory_space<smem>>
    %cst_249 = arith.constant 5.000000e-01 : f32
    %523 = vector.broadcast %cst_249 : f32 to vector<8x128xf32>
    %524 = arith.mulf %523, %521 : vector<8x128xf32>
    %cst_250 = arith.constant 0.707106769 : f32
    %525 = vector.broadcast %cst_250 : f32 to vector<8x128xf32>
    %526 = arith.mulf %521, %525 : vector<8x128xf32>
    %527 = math.erf %526 : vector<8x128xf32>
    %cst_251 = arith.constant 1.000000e+00 : f32
    %528 = vector.broadcast %cst_251 : f32 to vector<8x128xf32>
    %529 = arith.addf %528, %527 : vector<8x128xf32>
    %530 = arith.mulf %524, %529 : vector<8x128xf32>
    %531 = vector.broadcast %522 : f32 to vector<8x128xf32>
    %532 = arith.mulf %531, %530 : vector<8x128xf32>
    %533 = arith.addf %514, %532 : vector<8x128xf32>
    %c0_252 = arith.constant 0 : index
    %c0_253 = arith.constant 0 : index
    %c28 = arith.constant 28 : index
    %534 = vector.load %arg3[%c0_252, %c0_253, %c28] : memref<1x8x32xf32, #tpu.memory_space<vmem>>, vector<1x8x1xf32>
    %535 = vector.shape_cast %534 : vector<1x8x1xf32> to vector<8x1xf32>
    %c0_254 = arith.constant 0 : index
    %c28_255 = arith.constant 28 : index
    %c0_256 = arith.constant 0 : index
    %536 = vector.load %arg4[%c0_254, %c28_255, %c0_256] : memref<1x32x128xf32, #tpu.memory_space<vmem>>, vector<1x1x128xf32>
    %537 = vector.shape_cast %536 : vector<1x1x128xf32> to vector<1x128xf32>
    %538 = vector.broadcast %535 : vector<8x1xf32> to vector<8x128xf32>
    %539 = vector.broadcast %537 : vector<1x128xf32> to vector<8x128xf32>
    %540 = arith.addf %538, %539 : vector<8x128xf32>
    %c28_257 = arith.constant 28 : index
    %541 = memref.load %arg5[%c28_257] : memref<32xf32, #tpu.memory_space<smem>>
    %cst_258 = arith.constant 5.000000e-01 : f32
    %542 = vector.broadcast %cst_258 : f32 to vector<8x128xf32>
    %543 = arith.mulf %542, %540 : vector<8x128xf32>
    %cst_259 = arith.constant 0.707106769 : f32
    %544 = vector.broadcast %cst_259 : f32 to vector<8x128xf32>
    %545 = arith.mulf %540, %544 : vector<8x128xf32>
    %546 = math.erf %545 : vector<8x128xf32>
    %cst_260 = arith.constant 1.000000e+00 : f32
    %547 = vector.broadcast %cst_260 : f32 to vector<8x128xf32>
    %548 = arith.addf %547, %546 : vector<8x128xf32>
    %549 = arith.mulf %543, %548 : vector<8x128xf32>
    %550 = vector.broadcast %541 : f32 to vector<8x128xf32>
    %551 = arith.mulf %550, %549 : vector<8x128xf32>
    %552 = arith.addf %533, %551 : vector<8x128xf32>
    %c0_261 = arith.constant 0 : index
    %c0_262 = arith.constant 0 : index
    %c29 = arith.constant 29 : index
    %553 = vector.load %arg3[%c0_261, %c0_262, %c29] : memref<1x8x32xf32, #tpu.memory_space<vmem>>, vector<1x8x1xf32>
    %554 = vector.shape_cast %553 : vector<1x8x1xf32> to vector<8x1xf32>
    %c0_263 = arith.constant 0 : index
    %c29_264 = arith.constant 29 : index
    %c0_265 = arith.constant 0 : index
    %555 = vector.load %arg4[%c0_263, %c29_264, %c0_265] : memref<1x32x128xf32, #tpu.memory_space<vmem>>, vector<1x1x128xf32>
    %556 = vector.shape_cast %555 : vector<1x1x128xf32> to vector<1x128xf32>
    %557 = vector.broadcast %554 : vector<8x1xf32> to vector<8x128xf32>
    %558 = vector.broadcast %556 : vector<1x128xf32> to vector<8x128xf32>
    %559 = arith.addf %557, %558 : vector<8x128xf32>
    %c29_266 = arith.constant 29 : index
    %560 = memref.load %arg5[%c29_266] : memref<32xf32, #tpu.memory_space<smem>>
    %cst_267 = arith.constant 5.000000e-01 : f32
    %561 = vector.broadcast %cst_267 : f32 to vector<8x128xf32>
    %562 = arith.mulf %561, %559 : vector<8x128xf32>
    %cst_268 = arith.constant 0.707106769 : f32
    %563 = vector.broadcast %cst_268 : f32 to vector<8x128xf32>
    %564 = arith.mulf %559, %563 : vector<8x128xf32>
    %565 = math.erf %564 : vector<8x128xf32>
    %cst_269 = arith.constant 1.000000e+00 : f32
    %566 = vector.broadcast %cst_269 : f32 to vector<8x128xf32>
    %567 = arith.addf %566, %565 : vector<8x128xf32>
    %568 = arith.mulf %562, %567 : vector<8x128xf32>
    %569 = vector.broadcast %560 : f32 to vector<8x128xf32>
    %570 = arith.mulf %569, %568 : vector<8x128xf32>
    %571 = arith.addf %552, %570 : vector<8x128xf32>
    %c0_270 = arith.constant 0 : index
    %c0_271 = arith.constant 0 : index
    %c30 = arith.constant 30 : index
    %572 = vector.load %arg3[%c0_270, %c0_271, %c30] : memref<1x8x32xf32, #tpu.memory_space<vmem>>, vector<1x8x1xf32>
    %573 = vector.shape_cast %572 : vector<1x8x1xf32> to vector<8x1xf32>
    %c0_272 = arith.constant 0 : index
    %c30_273 = arith.constant 30 : index
    %c0_274 = arith.constant 0 : index
    %574 = vector.load %arg4[%c0_272, %c30_273, %c0_274] : memref<1x32x128xf32, #tpu.memory_space<vmem>>, vector<1x1x128xf32>
    %575 = vector.shape_cast %574 : vector<1x1x128xf32> to vector<1x128xf32>
    %576 = vector.broadcast %573 : vector<8x1xf32> to vector<8x128xf32>
    %577 = vector.broadcast %575 : vector<1x128xf32> to vector<8x128xf32>
    %578 = arith.addf %576, %577 : vector<8x128xf32>
    %c30_275 = arith.constant 30 : index
    %579 = memref.load %arg5[%c30_275] : memref<32xf32, #tpu.memory_space<smem>>
    %cst_276 = arith.constant 5.000000e-01 : f32
    %580 = vector.broadcast %cst_276 : f32 to vector<8x128xf32>
    %581 = arith.mulf %580, %578 : vector<8x128xf32>
    %cst_277 = arith.constant 0.707106769 : f32
    %582 = vector.broadcast %cst_277 : f32 to vector<8x128xf32>
    %583 = arith.mulf %578, %582 : vector<8x128xf32>
    %584 = math.erf %583 : vector<8x128xf32>
    %cst_278 = arith.constant 1.000000e+00 : f32
    %585 = vector.broadcast %cst_278 : f32 to vector<8x128xf32>
    %586 = arith.addf %585, %584 : vector<8x128xf32>
    %587 = arith.mulf %581, %586 : vector<8x128xf32>
    %588 = vector.broadcast %579 : f32 to vector<8x128xf32>
    %589 = arith.mulf %588, %587 : vector<8x128xf32>
    %590 = arith.addf %571, %589 : vector<8x128xf32>
    %c0_279 = arith.constant 0 : index
    %c0_280 = arith.constant 0 : index
    %c31 = arith.constant 31 : index
    %591 = vector.load %arg3[%c0_279, %c0_280, %c31] : memref<1x8x32xf32, #tpu.memory_space<vmem>>, vector<1x8x1xf32>
    %592 = vector.shape_cast %591 : vector<1x8x1xf32> to vector<8x1xf32>
    %c0_281 = arith.constant 0 : index
    %c31_282 = arith.constant 31 : index
    %c0_283 = arith.constant 0 : index
    %593 = vector.load %arg4[%c0_281, %c31_282, %c0_283] : memref<1x32x128xf32, #tpu.memory_space<vmem>>, vector<1x1x128xf32>
    %594 = vector.shape_cast %593 : vector<1x1x128xf32> to vector<1x128xf32>
    %595 = vector.broadcast %592 : vector<8x1xf32> to vector<8x128xf32>
    %596 = vector.broadcast %594 : vector<1x128xf32> to vector<8x128xf32>
    %597 = arith.addf %595, %596 : vector<8x128xf32>
    %c31_284 = arith.constant 31 : index
    %598 = memref.load %arg5[%c31_284] : memref<32xf32, #tpu.memory_space<smem>>
    %cst_285 = arith.constant 5.000000e-01 : f32
    %599 = vector.broadcast %cst_285 : f32 to vector<8x128xf32>
    %600 = arith.mulf %599, %597 : vector<8x128xf32>
    %cst_286 = arith.constant 0.707106769 : f32
    %601 = vector.broadcast %cst_286 : f32 to vector<8x128xf32>
    %602 = arith.mulf %597, %601 : vector<8x128xf32>
    %603 = math.erf %602 : vector<8x128xf32>
    %cst_287 = arith.constant 1.000000e+00 : f32
    %604 = vector.broadcast %cst_287 : f32 to vector<8x128xf32>
    %605 = arith.addf %604, %603 : vector<8x128xf32>
    %606 = arith.mulf %600, %605 : vector<8x128xf32>
    %607 = vector.broadcast %598 : f32 to vector<8x128xf32>
    %608 = arith.mulf %607, %606 : vector<8x128xf32>
    %609 = arith.addf %590, %608 : vector<8x128xf32>
    %c0_288 = arith.constant 0 : index
    %c0_289 = arith.constant 0 : index
    %c0_290 = arith.constant 0 : index
    %610 = vector.load %arg7[%c0_288, %c0_289, %c0_290] : memref<1x8x128xf32, #tpu.memory_space<vmem>>, vector<1x8x128xf32>
    %611 = vector.shape_cast %610 : vector<1x8x128xf32> to vector<8x128xf32>
    %612 = vector.shape_cast %609 : vector<8x128xf32> to vector<1x8x128xf32>
    tpu.vector_store %arg7[%c0_288, %c0_289, %c0_290], %612 {strides = array<i32>} : memref<1x8x128xf32, #tpu.memory_space<vmem>>, vector<1x8x128xf32>,
    return
  }
  func.func @transform_0(%arg0: i32, %arg1: i32, %arg2: i32) -> (i32, i32, i32) {
    %c0_i32 = arith.constant 0 : i32
    %c0_i32_0 = arith.constant 0 : i32
    return %arg0, %arg2, %c0_i32 : i32, i32, i32
  }
  func.func @transform_1(%arg0: i32, %arg1: i32, %arg2: i32) -> (i32, i32, i32) {
    %c0_i32 = arith.constant 0 : i32
    %c0_i32_0 = arith.constant 0 : i32
    return %arg0, %c0_i32, %arg1 : i32, i32, i32
  }
  func.func @transform_2(%arg0: i32, %arg1: i32, %arg2: i32) -> i32 {
    %c0_i32 = arith.constant 0 : i32
    %c0_i32_0 = arith.constant 0 : i32
    return %c0_i32 : i32
  }
  func.func @transform_3(%arg0: i32, %arg1: i32, %arg2: i32) -> i32 {
    %c0_i32 = arith.constant 0 : i32
    %c0_i32_0 = arith.constant 0 : i32
    return %c0_i32 : i32
  }
  func.func @transform_4(%arg0: i32, %arg1: i32, %arg2: i32) -> (i32, i32, i32) {
    %c0_i32 = arith.constant 0 : i32
    return %arg0, %arg2, %arg1 : i32, i32, i32
  }
}

</mosaic_0001>

<llo_original>
// kernel: cross_out_layer_2.2
$region0: #{cross_out_layer_2.2}
  #allocation0 [shape = 'u32[]', space=smem, size = 0x4, offset = 0x4, fixed_abs, tag = 'smem constant byte address 0x4 - core index']
  #allocation1 [shape = 'u32[144,128]{1,0:T(1,128)}', space=vmem, size = 0x12000, scoped, tag = 'internal scratch']
  %s0 = inlined_call_operand.vmem [shape: f32[2,8,32], index: 0, kind: input, shape index: {}]
  %s1 = inlined_call_operand.vmem [shape: f32[2,8,32], index: 1, kind: input, shape index: {}]
  %s2 = inlined_call_operand.vmem [shape: f32[2,128,32], index: 2, kind: input, shape index: {}]
  %s3 = inlined_call_operand.vmem [shape: f32[32,32], index: 3, kind: input, shape index: {}]
  %s4 = inlined_call_operand.vmem [shape: f32[32,32], index: 4, kind: input, shape index: {}]
  %s5 = inlined_call_operand.vmem [shape: f32[32,32], index: 5, kind: input, shape index: {}]
  %s6 = inlined_call_operand.vmem [shape: f32[1,32], index: 6, kind: input, shape index: {}]
  %s7 = inlined_call_operand.vmem [shape: f32[2,8,32], index: 7, kind: output, shape index: {0}]
  %s8 = inlined_call_operand.vmem [shape: f32[2,32,128], index: 8, kind: output, shape index: {1}]
  %9 = xla_tuple %s7, %s8
  %s10 = sld [smem:[#allocation0]]
  $region69: #{cross_out_layer_2.2} parent=0
    _
  %s12 = ssub.s32 1, %s10
  %s13 = scalar_select 0, %s12, %s10
  loop: start=0, step=1, limit=4
  $region2: #{cross_out_layer_2.2} parent=0 // loop_pre_header
    _
  $region3: #{cross_out_layer_2.2} parent=0 // loop_header
    %s15 = sphi 0, %s19
    %p16 = scmp.ge.s32.totalorder %s15, 4
    %s25 = sphi 0, %s27
    %s28 = sphi 0, %s25
    %s29 = sphi 0, %s28
    %s45 = sphi 0, %s29
    %s51 = sphi 0, %s53
    %s54 = sphi 0, %s51
    %s55 = sphi 0, %s54
    %s71 = sphi 0, %s55
    %s77 = sphi 0, %s79
    %s80 = sphi 0, %s77
    %s81 = sphi 0, %s80
    %s97 = sphi 0, %s81
    %s101 = sphi 0, %s101
    %s103 = sphi 0, %s101
    %s104 = sphi 0, %s103
    %s118 = sphi 0, %s104
    %s122 = sphi 0, %s122
    %s124 = sphi 0, %s122
    %s125 = sphi 0, %s124
    %s139 = sphi 0, %s125
    %s143 = sphi 0, %s143
    %s145 = sphi 0, %s143
    %s146 = sphi 0, %s145
    %s160 = sphi 0, %s146
    %s164 = sphi 0, %s164
    %s166 = sphi 0, %s164
    %s167 = sphi 0, %s166
    %s181 = sphi 0, %s167
    %s187 = sphi 0, %s189
    %s190 = sphi 0, %s187
    %s191 = sphi 0, %s190
    %s207 = sphi 0, %s191
    %s213 = sphi 0, %s215
    %s216 = sphi 0, %s213
    %s217 = sphi 0, %s216
    %s233 = sphi 0, %s217
  $region4: #{cross_out_layer_2.2} parent=0 // loop_header_branch
    %18 = sbr.rel (%p16) target = $region8
  $region5: #{cross_out_layer_2.2} parent=0 // loop_body
    %s20 = ssub.s32 %s15, 1
    %s21 = ssub.s32 %s15, 2
    %s22 = sadd.s32 %s15, 1
    %s23 = ssub.s32 %s15, %s22
    %p24 = scmp.eq.s32.totalorder %s23, 0
    %s26 = sadd.s32 %s25, 1
    %s27 = scalar_select %p24, %s25, %s26
    %p30 = pneg %p24
    %p31 = scmp.eq.s32.totalorder %s15, 1
    %p32 = por %p30, %p31
    %p33 = scmp.ne.s32.totalorder %s25, %s28
    %p34 = scmp.eq.s32.totalorder %s15, 0
    %p35 = por %p33, %p34
    %p36 = scmp.ne.s32.totalorder %s25, %s28
    %p37 = scmp.eq.s32.totalorder %s20, 1
    %p38 = por %p36, %p37
    %p39 = scmp.ne.s32.totalorder %s28, %s29
    %p40 = scmp.eq.s32.totalorder %s20, 0
    %p41 = por %p39, %p40
    %p42 = scmp.ne.s32.totalorder %s28, %s29
    %p43 = scmp.eq.s32.totalorder %s21, 1
    %p44 = por %p42, %p43
    %p46 = scmp.ne.s32.totalorder %s29, %s45
    %p47 = scmp.eq.s32.totalorder %s21, 0
    %p48 = por %p46, %p47
    %s49 = ssub.s32 %s15, %s22
    %p50 = scmp.eq.s32.totalorder %s49, 0
    %s52 = sadd.s32 %s51, 1
    %s53 = scalar_select %p50, %s51, %s52
    %p56 = pneg %p50
    %p57 = scmp.eq.s32.totalorder %s15, 1
    %p58 = por %p56, %p57
    %p59 = scmp.ne.s32.totalorder %s51, %s54
    %p60 = scmp.eq.s32.totalorder %s15, 0
    %p61 = por %p59, %p60
    %p62 = scmp.ne.s32.totalorder %s51, %s54
    %p63 = scmp.eq.s32.totalorder %s20, 1
    %p64 = por %p62, %p63
    %p65 = scmp.ne.s32.totalorder %s54, %s55
    %p66 = scmp.eq.s32.totalorder %s20, 0
    %p67 = por %p65, %p66
    %p68 = scmp.ne.s32.totalorder %s54, %s55
    %p69 = scmp.eq.s32.totalorder %s21, 1
    %p70 = por %p68, %p69
    %p72 = scmp.ne.s32.totalorder %s55, %s71
    %p73 = scmp.eq.s32.totalorder %s21, 0
    %p74 = por %p72, %p73
    %s75 = ssub.s32 %s15, %s22
    %p76 = scmp.eq.s32.totalorder %s75, 0
    %s78 = sadd.s32 %s77, 1
    %s79 = scalar_select %p76, %s77, %s78
    %p82 = pneg %p76
    %p83 = scmp.eq.s32.totalorder %s15, 1
    %p84 = por %p82, %p83
    %p85 = scmp.ne.s32.totalorder %s77, %s80
    %p86 = scmp.eq.s32.totalorder %s15, 0
    %p87 = por %p85, %p86
    %p88 = scmp.ne.s32.totalorder %s77, %s80
    %p89 = scmp.eq.s32.totalorder %s20, 1
    %p90 = por %p88, %p89
    %p91 = scmp.ne.s32.totalorder %s80, %s81
    %p92 = scmp.eq.s32.totalorder %s20, 0
    %p93 = por %p91, %p92
    %p94 = scmp.ne.s32.totalorder %s80, %s81
    %p95 = scmp.eq.s32.totalorder %s21, 1
    %p96 = por %p94, %p95
    %p98 = scmp.ne.s32.totalorder %s81, %s97
    %p99 = scmp.eq.s32.totalorder %s21, 0
    %p100 = por %p98, %p99
    %s102 = sadd.s32 %s101, 1
    %p105 = scmp.eq.s32.totalorder %s15, 1
    %p106 = scmp.ne.s32.totalorder %s101, %s103
    %p107 = scmp.eq.s32.totalorder %s15, 0
    %p108 = por %p106, %p107
    %p109 = scmp.ne.s32.totalorder %s101, %s103
    %p110 = scmp.eq.s32.totalorder %s20, 1
    %p111 = por %p109, %p110
    %p112 = scmp.ne.s32.totalorder %s103, %s104
    %p113 = scmp.eq.s32.totalorder %s20, 0
    %p114 = por %p112, %p113
    %p115 = scmp.ne.s32.totalorder %s103, %s104
    %p116 = scmp.eq.s32.totalorder %s21, 1
    %p117 = por %p115, %p116
    %p119 = scmp.ne.s32.totalorder %s104, %s118
    %p120 = scmp.eq.s32.totalorder %s21, 0
    %p121 = por %p119, %p120
    %s123 = sadd.s32 %s122, 1
    %p126 = scmp.eq.s32.totalorder %s15, 1
    %p127 = scmp.ne.s32.totalorder %s122, %s124
    %p128 = scmp.eq.s32.totalorder %s15, 0
    %p129 = por %p127, %p128
    %p130 = scmp.ne.s32.totalorder %s122, %s124
    %p131 = scmp.eq.s32.totalorder %s20, 1
    %p132 = por %p130, %p131
    %p133 = scmp.ne.s32.totalorder %s124, %s125
    %p134 = scmp.eq.s32.totalorder %s20, 0
    %p135 = por %p133, %p134
    %p136 = scmp.ne.s32.totalorder %s124, %s125
    %p137 = scmp.eq.s32.totalorder %s21, 1
    %p138 = por %p136, %p137
    %p140 = scmp.ne.s32.totalorder %s125, %s139
    %p141 = scmp.eq.s32.totalorder %s21, 0
    %p142 = por %p140, %p141
    %s144 = sadd.s32 %s143, 1
    %p147 = scmp.eq.s32.totalorder %s15, 1
    %p148 = scmp.ne.s32.totalorder %s143, %s145
    %p149 = scmp.eq.s32.totalorder %s15, 0
    %p150 = por %p148, %p149
    %p151 = scmp.ne.s32.totalorder %s143, %s145
    %p152 = scmp.eq.s32.totalorder %s20, 1
    %p153 = por %p151, %p152
    %p154 = scmp.ne.s32.totalorder %s145, %s146
    %p155 = scmp.eq.s32.totalorder %s20, 0
    %p156 = por %p154, %p155
    %p157 = scmp.ne.s32.totalorder %s145, %s146
    %p158 = scmp.eq.s32.totalorder %s21, 1
    %p159 = por %p157, %p158
    %p161 = scmp.ne.s32.totalorder %s146, %s160
    %p162 = scmp.eq.s32.totalorder %s21, 0
    %p163 = por %p161, %p162
    %s165 = sadd.s32 %s164, 1
    %p168 = scmp.eq.s32.totalorder %s15, 1
    %p169 = scmp.ne.s32.totalorder %s164, %s166
    %p170 = scmp.eq.s32.totalorder %s15, 0
    %p171 = por %p169, %p170
    %p172 = scmp.ne.s32.totalorder %s164, %s166
    %p173 = scmp.eq.s32.totalorder %s20, 1
    %p174 = por %p172, %p173
    %p175 = scmp.ne.s32.totalorder %s166, %s167
    %p176 = scmp.eq.s32.totalorder %s20, 0
    %p177 = por %p175, %p176
    %p178 = scmp.ne.s32.totalorder %s166, %s167
    %p179 = scmp.eq.s32.totalorder %s21, 1
    %p180 = por %p178, %p179
    %p182 = scmp.ne.s32.totalorder %s167, %s181
    %p183 = scmp.eq.s32.totalorder %s21, 0
    %p184 = por %p182, %p183
    %s185 = ssub.s32 %s15, %s22
    %p186 = scmp.eq.s32.totalorder %s185, 0
    %s188 = sadd.s32 %s187, 1
    %s189 = scalar_select %p186, %s187, %s188
    %p192 = pneg %p186
    %p193 = scmp.eq.s32.totalorder %s15, 1
    %p194 = por %p192, %p193
    %p195 = scmp.ne.s32.totalorder %s187, %s190
    %p196 = scmp.eq.s32.totalorder %s15, 0
    %p197 = por %p195, %p196
    %p198 = scmp.ne.s32.totalorder %s187, %s190
    %p199 = scmp.eq.s32.totalorder %s20, 1
    %p200 = por %p198, %p199
    %p201 = scmp.ne.s32.totalorder %s190, %s191
    %p202 = scmp.eq.s32.totalorder %s20, 0
    %p203 = por %p201, %p202
    %p204 = scmp.ne.s32.totalorder %s190, %s191
    %p205 = scmp.eq.s32.totalorder %s21, 1
    %p206 = por %p204, %p205
    %p208 = scmp.ne.s32.totalorder %s191, %s207
    %p209 = scmp.eq.s32.totalorder %s21, 0
    %p210 = por %p208, %p209
    %s211 = ssub.s32 %s15, %s22
    %p212 = scmp.eq.s32.totalorder %s211, 0
    %s214 = sadd.s32 %s213, 1
    %s215 = scalar_select %p212, %s213, %s214
    %p218 = pneg %p212
    %p219 = scmp.eq.s32.totalorder %s15, 1
    %p220 = por %p218, %p219
    %p221 = scmp.ne.s32.totalorder %s213, %s216
    %p222 = scmp.eq.s32.totalorder %s15, 0
    %p223 = por %p221, %p222
    %p224 = scmp.ne.s32.totalorder %s213, %s216
    %p225 = scmp.eq.s32.totalorder %s20, 1
    %p226 = por %p224, %p225
    %p227 = scmp.ne.s32.totalorder %s216, %s217
    %p228 = scmp.eq.s32.totalorder %s20, 0
    %p229 = por %p227, %p228
    %p230 = scmp.ne.s32.totalorder %s216, %s217
    %p231 = scmp.eq.s32.totalorder %s21, 1
    %p232 = por %p230, %p231
    %p234 = scmp.ne.s32.totalorder %s217, %s233
    %p235 = scmp.eq.s32.totalorder %s21, 0
    %p236 = por %p234, %p235
    %p237 = scmp.le.s32.totalorder 1, %s15
    %p238 = scmp.lt.s32.totalorder %s15, 3
    %p239 = pnand %p237, %p238
    %p240 = pneg %p239
    // Predicated region
    $region9: #{cross_out_layer_2.2} parent=5 // pred_check
      _
    $region10: #{cross_out_layer_2.2} parent=5 // pred_check_branch
      %242 = sbr.rel (%p239) target = $region12
    $region11: #{cross_out_layer_2.2} parent=5 // pred_region
      %s243 = ssub.s32 %s15, 1
      // Predicated region
      $region13: #{cross_out_layer_2.2} parent=11 // pred_check
        %p244 = pneg %p114
      $region14: #{cross_out_layer_2.2} parent=11 // pred_check_branch
        %246 = sbr.rel (%p244) target = $region16
      $region15: #{cross_out_layer_2.2} parent=11 // pred_region
        _
      $region16: #{cross_out_layer_2.2} parent=11 // pred_fallthru
        _
      // Predicated region
      $region17: #{cross_out_layer_2.2} parent=11 // pred_check
        %p247 = pneg %p135
      $region18: #{cross_out_layer_2.2} parent=11 // pred_check_branch
        %249 = sbr.rel (%p247) target = $region20
      $region19: #{cross_out_layer_2.2} parent=11 // pred_region
        _
      $region20: #{cross_out_layer_2.2} parent=11 // pred_fallthru
        _
      // Predicated region
      $region21: #{cross_out_layer_2.2} parent=11 // pred_check
        %p250 = pneg %p156
      $region22: #{cross_out_layer_2.2} parent=11 // pred_check_branch
        %252 = sbr.rel (%p250) target = $region24
      $region23: #{cross_out_layer_2.2} parent=11 // pred_region
        _
      $region24: #{cross_out_layer_2.2} parent=11 // pred_fallthru
        _
      // Predicated region
      $region25: #{cross_out_layer_2.2} parent=11 // pred_check
        %p253 = pneg %p177
      $region26: #{cross_out_layer_2.2} parent=11 // pred_check_branch
        %255 = sbr.rel (%p253) target = $region28
      $region27: #{cross_out_layer_2.2} parent=11 // pred_region
        _
      $region28: #{cross_out_layer_2.2} parent=11 // pred_fallthru
        _
    $region12: #{cross_out_layer_2.2} parent=5 // pred_fallthru
      _
    %p256 = scmp.lt.s32.totalorder %s15, 2
    // Predicated region
    $region29: #{cross_out_layer_2.2} parent=5 // pred_check
      %p257 = pneg %p256
    $region30: #{cross_out_layer_2.2} parent=5 // pred_check_branch
      %259 = sbr.rel (%p257) target = $region32
    $region31: #{cross_out_layer_2.2} parent=5 // pred_region
      // Predicated region
      $region33: #{cross_out_layer_2.2} parent=31 // pred_check
        %p260 = pneg %p35
      $region34: #{cross_out_layer_2.2} parent=31 // pred_check_branch
        %262 = sbr.rel (%p260) target = $region36
      $region35: #{cross_out_layer_2.2} parent=31 // pred_region
        %p263 = scmp.lt.s32.totalorder %s15, 1
        %s264 = scalar_select %p263, %s15, 1
        %s265 = smul.addr %s264, 8
        %s266 = scalar_lea.vmem %s0, %s265
      $region36: #{cross_out_layer_2.2} parent=31 // pred_fallthru
        _
      // Predicated region
      $region37: #{cross_out_layer_2.2} parent=31 // pred_check
        %p267 = pneg %p61
      $region38: #{cross_out_layer_2.2} parent=31 // pred_check_branch
        %269 = sbr.rel (%p267) target = $region40
      $region39: #{cross_out_layer_2.2} parent=31 // pred_region
        %p270 = scmp.lt.s32.totalorder %s15, 1
        %s271 = scalar_select %p270, %s15, 1
        %s272 = smul.addr %s271, 8
        %s273 = scalar_lea.vmem %s1, %s272
      $region40: #{cross_out_layer_2.2} parent=31 // pred_fallthru
        _
      // Predicated region
      $region41: #{cross_out_layer_2.2} parent=31 // pred_check
        %p274 = pneg %p87
      $region42: #{cross_out_layer_2.2} parent=31 // pred_check_branch
        %276 = sbr.rel (%p274) target = $region44
      $region43: #{cross_out_layer_2.2} parent=31 // pred_region
        %p277 = scmp.lt.s32.totalorder %s15, 1
        %s278 = scalar_select %p277, %s15, 1
        %s279 = smul.addr %s278, 16
        %s280 = smul.addr %s279, 8
        %s281 = scalar_lea.vmem %s2, %s280
      $region44: #{cross_out_layer_2.2} parent=31 // pred_fallthru
        _
    $region32: #{cross_out_layer_2.2} parent=5 // pred_fallthru
      _
    %p282 = scmp.le.s32.totalorder 1, %s15
    %p283 = scmp.lt.s32.totalorder %s15, 3
    %p284 = pnand %p282, %p283
    %p285 = pneg %p284
    // Predicated region
    $region45: #{cross_out_layer_2.2} parent=5 // pred_check
      _
    $region46: #{cross_out_layer_2.2} parent=5 // pred_check_branch
      %287 = sbr.rel (%p284) target = $region48
    $region47: #{cross_out_layer_2.2} parent=5 // pred_region
      %s288 = ssub.s32 %s15, 1
      %p289 = scmp.lt.s32.totalorder %s20, 1
      %s290 = scalar_select %p289, %s20, 1
      %s291 = smul.addr %s290, 8
      %s292 = scalar_lea.vmem %s0, %s291
      %p293 = pneg %p41
      %p294 = pneg %p38
      %p295 = scmp.lt.s32.totalorder %s20, 1
      %s296 = scalar_select %p295, %s20, 1
      %s297 = smul.addr %s296, 8
      %s298 = scalar_lea.vmem %s1, %s297
      %p299 = pneg %p67
      %p300 = pneg %p64
      %p301 = scmp.lt.s32.totalorder %s20, 1
      %s302 = scalar_select %p301, %s20, 1
      %s303 = smul.addr %s302, 16
      %s304 = smul.addr %s303, 8
      %s305 = scalar_lea.vmem %s2, %s304
      %p306 = pneg %p93
      %p307 = pneg %p90
      %p308 = pneg %p114
      %p309 = pneg %p111
      %p310 = pneg %p135
      %p311 = pneg %p132
      %p312 = pneg %p156
      %p313 = pneg %p153
      %p314 = pneg %p177
      %p315 = pneg %p174
      %p316 = pneg %p203
      %p317 = pneg %p200
      %p318 = scmp.lt.s32.totalorder %s20, 1
      %s319 = scalar_select %p318, %s20, 1
      %s320 = smul.addr %s319, 8
      %s321 = scalar_lea.vmem %s7, %s320
      %p322 = pneg %p229
      %p323 = pneg %p226
      %p324 = scmp.lt.s32.totalorder %s20, 1
      %s325 = scalar_select %p324, %s20, 1
      %s326 = smul.addr %s325, 4
      %s327 = smul.addr %s326, 8
      %s328 = scalar_lea.vmem %s8, %s327
      %p329 = scmp.lt.s32.totalorder %s20, 1
      %s330 = scalar_select %p329, %s20, 1
      %s331 = smul.addr %s330, 8
      %s332 = scalar_lea.vmem %s0, %s331
      %p333 = scmp.lt.s32.totalorder %s20, 1
      %s334 = scalar_select %p333, %s20, 1
      %s335 = smul.addr %s334, 8
      %s336 = scalar_lea.vmem %s1, %s335
      %p337 = scmp.lt.s32.totalorder %s20, 1
      %s338 = scalar_select %p337, %s20, 1
      %s339 = smul.addr %s338, 16
      %s340 = smul.addr %s339, 8
      %s341 = scalar_lea.vmem %s2, %s340
      %p342 = scmp.lt.s32.totalorder %s20, 1
      %s343 = scalar_select %p342, %s20, 1
      %s344 = smul.addr %s343, 8
      %s345 = scalar_lea.vmem %s7, %s344
      %p346 = scmp.lt.s32.totalorder %s20, 1
      %s347 = scalar_select %p346, %s20, 1
      %s348 = smul.addr %s347, 4
      %s349 = smul.addr %s348, 8
      %s350 = scalar_lea.vmem %s8, %s349
      %v351 = vld [vmem:[%s332] sm:$0xff]
      %v352 = vld [vmem:[%s3] sm:$0xff]
      %v353 = vld [vmem:[%s3 + $0x8] sm:$0xff]
      %v354 = vld [vmem:[%s3 + $0x10] sm:$0xff]
      %v355 = vld [vmem:[%s3 + $0x18] sm:$0xff]
      %v356 = vld [vmem:[%s336] sm:$0xff]
      %v357 = vld [vmem:[%s4] sm:$0xff]
      %v358 = vld [vmem:[%s4 + $0x8] sm:$0xff]
      %v359 = vld [vmem:[%s4 + $0x10] sm:$0xff]
      %v360 = vld [vmem:[%s4 + $0x18] sm:$0xff]
      %vm361 = vcmask 261120
      %v363 = vsel %vm361, %v356, 0
      %365 = vmatprep.subr.mxu0 0.0
      %366 = vmatpush1.msra.mxu0 %v357
      %367 = vmatprep.subr.mxu0 0.0
      %368 = vmatpush1.msra.mxu0 %v358
      %369 = vmatprep.subr.mxu0 0.0
      %370 = vmatpush1.msra.mxu0 %v359
      %371 = vmatprep.subr.mxu0 0.0
      %372 = vmatpush1.msra.mxu0 %v360
      %373 = vmatprep.subr.mxu0 0.0
      %374 = vmatpush1.msra.mxu0 0.0
      %375 = vmatprep.subr.mxu0 0.0
      %376 = vmatpush1.msra.mxu0 0.0
      %377 = vmatprep.subr.mxu0 0.0
      %378 = vmatpush1.msra.mxu0 0.0
      %379 = vmatprep.subr.mxu0 0.0
      %380 = vmatpush1.msra.mxu0 0.0
      %381 = vmatprep.subr.mxu0 0.0
      %382 = vmatpush1.msra.mxu0 0.0
      %383 = vmatprep.subr.mxu0 0.0
      %384 = vmatpush1.msra.mxu0 0.0
      %385 = vmatprep.subr.mxu0 0.0
      %386 = vmatpush1.msra.mxu0 0.0
      %387 = vmatprep.subr.mxu0 0.0
      %388 = vmatpush1.msra.mxu0 0.0
      %389 = vmatprep.subr.mxu0 0.0
      %390 = vmatpush1.msra.mxu0 0.0
      %391 = vmatprep.subr.mxu0 0.0
      %392 = vmatpush1.msra.mxu0 0.0
      %393 = vmatprep.subr.mxu0 0.0
      %394 = vmatpush1.msra.mxu0 0.0
      %395 = vmatprep.subr.mxu0 0.0
      %396 = vmatpush1.msra.mxu0 0.0
      %397 = vmatprep.subr.mxu0 0.0
      %398 = vmatpush1.msra.mxu0 0.0
      %399 = vmatprep.subr.mxu0 0.0
      %400 = vmatpush1.msra.mxu0 0.0
      %401 = vmatprep.subr.mxu0 0.0
      %402 = vmatpush1.msra.mxu0 0.0
      %403 = vmatprep.subr.mxu0 0.0
      %404 = vmatpush1.msra.mxu0 0.0
      %405 = vmatprep.subr.mxu0 0.0
      %406 = vmatpush1.msra.mxu0 0.0
      %407 = vmatprep.subr.mxu0 0.0
      %408 = vmatpush1.msra.mxu0 0.0
      %409 = vmatprep.subr.mxu0 0.0
      %410 = vmatpush1.msra.mxu0 0.0
      %411 = vmatprep.subr.mxu0 0.0
      %412 = vmatpush1.msra.mxu0 0.0
      %413 = vmatprep.subr.mxu0 0.0
      %414 = vmatpush1.msra.mxu0 0.0
      %415 = vmatprep.subr.mxu0 0.0
      %416 = vmatpush1.msra.mxu0 0.0
      %417 = vmatprep.subr.mxu0 0.0
      %418 = vmatpush1.msra.mxu0 0.0
      %419 = vmatprep.subr.mxu0 0.0
      %420 = vmatpush1.msra.mxu0 0.0
      %421 = vmatprep.subr.mxu0 0.0
      %422 = vmatpush1.msra.mxu0 0.0
      %423 = vmatprep.subr.mxu0 0.0
      %424 = vmatpush1.msra.mxu0 0.0
      %425 = vmatprep.subr.mxu0 0.0
      %426 = vmatpush1.msra.mxu0 0.0
      %427 = vmatprep.subr.mxu0 0.0
      %428 = vmatpush1.msra.mxu0 0.0
      %429 = vmatprep.mubr.f32.mxu0 0.0
      %430 = vmatmul.mubr.f32.gmra.mrb[0].mxu0 %v363
      %v431 = vpop.f32.mrb[0].mxu0
      %v432 = vadd.f32 0.0, %v431
      %v433 = vpop.f32.mrb[0].mxu0
      %434 = vdwg.mxu0
      %v436 = vsel %vm361, %v351, 0
      %438 = vmatprep.subr.mxu0 0.0
      %439 = vmatpush1.msra.mxu0 %v352
      %440 = vmatprep.subr.mxu0 0.0
      %441 = vmatpush1.msra.mxu0 %v353
      %442 = vmatprep.subr.mxu0 0.0
      %443 = vmatpush1.msra.mxu0 %v354
      %444 = vmatprep.subr.mxu0 0.0
      %445 = vmatpush1.msra.mxu0 %v355
      %446 = vmatprep.subr.mxu0 0.0
      %447 = vmatpush1.msra.mxu0 0.0
      %448 = vmatprep.subr.mxu0 0.0
      %449 = vmatpush1.msra.mxu0 0.0
      %450 = vmatprep.subr.mxu0 0.0
      %451 = vmatpush1.msra.mxu0 0.0
      %452 = vmatprep.subr.mxu0 0.0
      %453 = vmatpush1.msra.mxu0 0.0
      %454 = vmatprep.subr.mxu0 0.0
      %455 = vmatpush1.msra.mxu0 0.0
      %456 = vmatprep.subr.mxu0 0.0
      %457 = vmatpush1.msra.mxu0 0.0
      %458 = vmatprep.subr.mxu0 0.0
      %459 = vmatpush1.msra.mxu0 0.0
      %460 = vmatprep.subr.mxu0 0.0
      %461 = vmatpush1.msra.mxu0 0.0
      %462 = vmatprep.subr.mxu0 0.0
      %463 = vmatpush1.msra.mxu0 0.0
      %464 = vmatprep.subr.mxu0 0.0
      %465 = vmatpush1.msra.mxu0 0.0
      %466 = vmatprep.subr.mxu0 0.0
      %467 = vmatpush1.msra.mxu0 0.0
      %468 = vmatprep.subr.mxu0 0.0
      %469 = vmatpush1.msra.mxu0 0.0
      %470 = vmatprep.subr.mxu0 0.0
      %471 = vmatpush1.msra.mxu0 0.0
      %472 = vmatprep.subr.mxu0 0.0
      %473 = vmatpush1.msra.mxu0 0.0
      %474 = vmatprep.subr.mxu0 0.0
      %475 = vmatpush1.msra.mxu0 0.0
      %476 = vmatprep.subr.mxu0 0.0
      %477 = vmatpush1.msra.mxu0 0.0
      %478 = vmatprep.subr.mxu0 0.0
      %479 = vmatpush1.msra.mxu0 0.0
      %480 = vmatprep.subr.mxu0 0.0
      %481 = vmatpush1.msra.mxu0 0.0
      %482 = vmatprep.subr.mxu0 0.0
      %483 = vmatpush1.msra.mxu0 0.0
      %484 = vmatprep.subr.mxu0 0.0
      %485 = vmatpush1.msra.mxu0 0.0
      %486 = vmatprep.subr.mxu0 0.0
      %487 = vmatpush1.msra.mxu0 0.0
      %488 = vmatprep.subr.mxu0 0.0
      %489 = vmatpush1.msra.mxu0 0.0
      %490 = vmatprep.subr.mxu0 0.0
      %491 = vmatpush1.msra.mxu0 0.0
      %492 = vmatprep.subr.mxu0 0.0
      %493 = vmatpush1.msra.mxu0 0.0
      %494 = vmatprep.subr.mxu0 0.0
      %495 = vmatpush1.msra.mxu0 0.0
      %496 = vmatprep.subr.mxu0 0.0
      %497 = vmatpush1.msra.mxu0 0.0
      %498 = vmatprep.subr.mxu0 0.0
      %499 = vmatpush1.msra.mxu0 0.0
      %500 = vmatprep.subr.mxu0 0.0
      %501 = vmatpush1.msra.mxu0 0.0
      %502 = vmatprep.mubr.f32.mxu0 0.0
      %503 = vmatmul.mubr.f32.gmra.mrb[0].mxu0 %v436
      %v504 = vpop.f32.mrb[0].mxu0
      %v505 = vadd.f32 %v432, %v504
      %v506 = vpop.f32.mrb[0].mxu0
      %507 = vdwg.mxu0
      %v508 = vld [vmem:[%s6] sm:$0x1]
      %v510 = vlaneseq
      %v511 = vshrl.u32 %v510, 7
      %v512 = vsub.s32 0, %v511
      %v513 = vrot.slane %v508, %v512
      %v515 = vadd.f32 %v505, %v513
      %516 = vst.msk [vmem:[%s345] sm:$0xff] %vm361, %v515
      %v517 = vld [vmem:[%s5] sm:$0xff]
      %v518 = vld [vmem:[%s5 + $0x8] sm:$0xff]
      %v519 = vld [vmem:[%s5 + $0x10] sm:$0xff]
      %v520 = vld [vmem:[%s5 + $0x18] sm:$0xff]
      %v521 = vld [vmem:[%s341] sm:$0xff]
      %v522 = vld [vmem:[%s341 + $0x8] sm:$0xff]
      %v523 = vld [vmem:[%s341 + $0x10] sm:$0xff]
      %v524 = vld [vmem:[%s341 + $0x18] sm:$0xff]
      %v525 = vld [vmem:[%s341 + $0x20] sm:$0xff]
      %v526 = vld [vmem:[%s341 + $0x28] sm:$0xff]
      %v527 = vld [vmem:[%s341 + $0x30] sm:$0xff]
      %v528 = vld [vmem:[%s341 + $0x38] sm:$0xff]
      %v529 = vld [vmem:[%s341 + $0x40] sm:$0xff]
      %v530 = vld [vmem:[%s341 + $0x48] sm:$0xff]
      %v531 = vld [vmem:[%s341 + $0x50] sm:$0xff]
      %v532 = vld [vmem:[%s341 + $0x58] sm:$0xff]
      %v533 = vld [vmem:[%s341 + $0x60] sm:$0xff]
      %v534 = vld [vmem:[%s341 + $0x68] sm:$0xff]
      %v535 = vld [vmem:[%s341 + $0x70] sm:$0xff]
      %v536 = vld [vmem:[%s341 + $0x78] sm:$0xff]
      %v538 = vsel %vm361, %v517, 0
      %v541 = vsel %vm361, %v518, 0
      %v544 = vsel %vm361, %v519, 0
      %v547 = vsel %vm361, %v520, 0
      %v550 = vsel %vm361, %v521, 0
      %v553 = vsel %vm361, %v522, 0
      %v556 = vsel %vm361, %v523, 0
      %v559 = vsel %vm361, %v524, 0
      %v562 = vsel %vm361, %v525, 0
      %v565 = vsel %vm361, %v526, 0
      %v568 = vsel %vm361, %v527, 0
      %v571 = vsel %vm361, %v528, 0
      %v574 = vsel %vm361, %v529, 0
      %v577 = vsel %vm361, %v530, 0
      %v580 = vsel %vm361, %v531, 0
      %v583 = vsel %vm361, %v532, 0
      %v586 = vsel %vm361, %v533, 0
      %v589 = vsel %vm361, %v534, 0
      %v592 = vsel %vm361, %v535, 0
      %v595 = vsel %vm361, %v536, 0
      %597 = vmatprep.subr.mxu0 0.0
      %598 = vmatpush1.xpose.msra.mxu0 %v550
      %599 = vmatprep.subr.mxu0 0.0
      %600 = vmatpush1.xpose.msra.mxu0 %v553
      %601 = vmatprep.subr.mxu0 0.0
      %602 = vmatpush1.xpose.msra.mxu0 %v556
      %603 = vmatprep.subr.mxu0 0.0
      %604 = vmatpush1.xpose.msra.mxu0 %v559
      %605 = vmatprep.subr.mxu0 0.0
      %606 = vmatpush1.xpose.msra.mxu0 %v562
      %607 = vmatprep.subr.mxu0 0.0
      %608 = vmatpush1.xpose.msra.mxu0 %v565
      %609 = vmatprep.subr.mxu0 0.0
      %610 = vmatpush1.xpose.msra.mxu0 %v568
      %611 = vmatprep.subr.mxu0 0.0
      %612 = vmatpush1.xpose.msra.mxu0 %v571
      %613 = vmatprep.subr.mxu0 0.0
      %614 = vmatpush1.xpose.msra.mxu0 %v574
      %615 = vmatprep.subr.mxu0 0.0
      %616 = vmatpush1.xpose.msra.mxu0 %v577
      %617 = vmatprep.subr.mxu0 0.0
      %618 = vmatpush1.xpose.msra.mxu0 %v580
      %619 = vmatprep.subr.mxu0 0.0
      %620 = vmatpush1.xpose.msra.mxu0 %v583
      %621 = vmatprep.subr.mxu0 0.0
      %622 = vmatpush1.xpose.msra.mxu0 %v586
      %623 = vmatprep.subr.mxu0 0.0
      %624 = vmatpush1.xpose.msra.mxu0 %v589
      %625 = vmatprep.subr.mxu0 0.0
      %626 = vmatpush1.xpose.msra.mxu0 %v592
      %627 = vmatprep.subr.mxu0 0.0
      %628 = vmatpush1.xpose.msra.mxu0 %v595
      %629 = vmatprep.subr.mxu0 0.0
      %630 = vmatpush1.xpose.msra.mxu0 0.0
      %631 = vmatprep.subr.mxu0 0.0
      %632 = vmatpush1.xpose.msra.mxu0 0.0
      %633 = vmatprep.subr.mxu0 0.0
      %634 = vmatpush1.xpose.msra.mxu0 0.0
      %635 = vmatprep.subr.mxu0 0.0
      %636 = vmatpush1.xpose.msra.mxu0 0.0
      %637 = vmatprep.subr.mxu0 0.0
      %638 = vmatpush1.xpose.msra.mxu0 0.0
      %639 = vmatprep.subr.mxu0 0.0
      %640 = vmatpush1.xpose.msra.mxu0 0.0
      %641 = vmatprep.subr.mxu0 0.0
      %642 = vmatpush1.xpose.msra.mxu0 0.0
      %643 = vmatprep.subr.mxu0 0.0
      %644 = vmatpush1.xpose.msra.mxu0 0.0
      %645 = vmatprep.subr.mxu0 0.0
      %646 = vmatpush1.xpose.msra.mxu0 0.0
      %647 = vmatprep.subr.mxu0 0.0
      %648 = vmatpush1.xpose.msra.mxu0 0.0
      %649 = vmatprep.subr.mxu0 0.0
      %650 = vmatpush1.xpose.msra.mxu0 0.0
      %651 = vmatprep.subr.mxu0 0.0
      %652 = vmatpush1.xpose.msra.mxu0 0.0
      %653 = vmatprep.subr.mxu0 0.0
      %654 = vmatpush1.xpose.msra.mxu0 0.0
      %655 = vmatprep.subr.mxu0 0.0
      %656 = vmatpush1.xpose.msra.mxu0 0.0
      %657 = vmatprep.subr.mxu0 0.0
      %658 = vmatpush1.xpose.msra.mxu0 0.0
      %659 = vmatprep.subr.mxu0 0.0
      %660 = vmatpush1.xpose.msra.mxu0 0.0
      %661 = vmatprep.mubr.f32.mxu0 0.0
      %662 = vmatmul.mubr.f32.gmra.mrb[0].mxu0 %v538
      %v663 = vpop.f32.mrb[0].mxu0
      %v664 = vadd.f32 0.0, %v663
      %v665 = vpop.f32.mrb[0].mxu0
      %666 = vmatprep.mubr.f32.mxu0 0.0
      %667 = vmatmul.mubr.f32.gmra.mrb[0].mxu0 %v541
      %v668 = vpop.f32.mrb[0].mxu0
      %v669 = vadd.f32 0.0, %v668
      %v670 = vpop.f32.mrb[0].mxu0
      %671 = vmatprep.mubr.f32.mxu0 0.0
      %672 = vmatmul.mubr.f32.gmra.mrb[0].mxu0 %v544
      %v673 = vpop.f32.mrb[0].mxu0
      %v674 = vadd.f32 0.0, %v673
      %v675 = vpop.f32.mrb[0].mxu0
      %676 = vmatprep.mubr.f32.mxu0 0.0
      %677 = vmatmul.mubr.f32.gmra.mrb[0].mxu0 %v547
      %v678 = vpop.f32.mrb[0].mxu0
      %v679 = vadd.f32 0.0, %v678
      %v680 = vpop.f32.mrb[0].mxu0
      %681 = vdwg.mxu0
      %682 = vst [vmem:[%s350] sm:$0xff] %v664
      %683 = vst [vmem:[%s350 + $0x8] sm:$0xff] %v669
      %684 = vst [vmem:[%s350 + $0x10] sm:$0xff] %v674
      %685 = vst [vmem:[%s350 + $0x18] sm:$0xff] %v679
      %p686 = scmp.lt.s32.totalorder %s20, 1
      %s687 = scalar_select %p686, %s20, 1
      %s688 = smul.addr %s687, 8
      %s689 = scalar_lea.vmem %s7, %s688
      %p690 = scmp.lt.s32.totalorder %s20, 1
      %s691 = scalar_select %p690, %s20, 1
      %s692 = smul.addr %s691, 4
      %s693 = smul.addr %s692, 8
      %s694 = scalar_lea.vmem %s8, %s693
      // Predicated region
      $region49: #{cross_out_layer_2.2} parent=47 // pred_check
        %p695 = pneg %p200
      $region50: #{cross_out_layer_2.2} parent=47 // pred_check_branch
        %697 = sbr.rel (%p695) target = $region52
      $region51: #{cross_out_layer_2.2} parent=47 // pred_region
        _
      $region52: #{cross_out_layer_2.2} parent=47 // pred_fallthru
        _
      // Predicated region
      $region53: #{cross_out_layer_2.2} parent=47 // pred_check
        %p698 = pneg %p226
      $region54: #{cross_out_layer_2.2} parent=47 // pred_check_branch
        %700 = sbr.rel (%p698) target = $region56
      $region55: #{cross_out_layer_2.2} parent=47 // pred_region
        _
      $region56: #{cross_out_layer_2.2} parent=47 // pred_fallthru
        _
    $region48: #{cross_out_layer_2.2} parent=5 // pred_fallthru
      _
    %p701 = scmp.le.s32.totalorder 2, %s15
    // Predicated region
    $region57: #{cross_out_layer_2.2} parent=5 // pred_check
      %p702 = pneg %p701
    $region58: #{cross_out_layer_2.2} parent=5 // pred_check_branch
      %704 = sbr.rel (%p702) target = $region60
    $region59: #{cross_out_layer_2.2} parent=5 // pred_region
      %s705 = ssub.s32 %s15, 2
      // Predicated region
      $region61: #{cross_out_layer_2.2} parent=59 // pred_check
        %p706 = pneg %p206
      $region62: #{cross_out_layer_2.2} parent=59 // pred_check_branch
        %708 = sbr.rel (%p706) target = $region64
      $region63: #{cross_out_layer_2.2} parent=59 // pred_region
        %p709 = scmp.lt.s32.totalorder %s21, 1
        %s710 = scalar_select %p709, %s21, 1
        %s711 = smul.addr %s710, 8
        %s712 = scalar_lea.vmem %s7, %s711
      $region64: #{cross_out_layer_2.2} parent=59 // pred_fallthru
        _
      // Predicated region
      $region65: #{cross_out_layer_2.2} parent=59 // pred_check
        %p713 = pneg %p232
      $region66: #{cross_out_layer_2.2} parent=59 // pred_check_branch
        %715 = sbr.rel (%p713) target = $region68
      $region67: #{cross_out_layer_2.2} parent=59 // pred_region
        %p716 = scmp.lt.s32.totalorder %s21, 1
        %s717 = scalar_select %p716, %s21, 1
        %s718 = smul.addr %s717, 4
        %s719 = smul.addr %s718, 8
        %s720 = scalar_lea.vmem %s8, %s719
      $region68: #{cross_out_layer_2.2} parent=59 // pred_fallthru
        _
    $region60: #{cross_out_layer_2.2} parent=5 // pred_fallthru
      _
  $region6: #{cross_out_layer_2.2} parent=0 // loop_footer
    %s19 = sadd.s32 1, %s15
  $region7: #{cross_out_layer_2.2} parent=0 // loop_footer_branch
    %14 = sbr.rel target = $region3
  $region8: #{cross_out_layer_2.2} parent=0 // loop_exit
    _

// kernel: cross_out_layer_2.3
$region0: #{cross_out_layer_2.3}
  #allocation0 [shape = 'u32[]', space=smem, size = 0x4, offset = 0x4, fixed_abs, tag = 'smem constant byte address 0x4 - core index']
  #allocation1 [shape = 'u32[144,128]{1,0:T(1,128)}', space=vmem, size = 0x12000, scoped, tag = 'internal scratch']
  #allocation2 [shape = 'f32[1]{0:T(128)S(6)}', space=smem, size = 0x200, scoped, tag = 'scoped memory for cross_out_layer_2.3']
  %s0 = inlined_call_operand.vmem [shape: f32[2,8,32], index: 0, kind: input, shape index: {}]
  %s1 = inlined_call_operand.vmem [shape: f32[2,32,128], index: 1, kind: input, shape index: {}]
  %s2 = inlined_call_operand.vmem [shape: f32[32], index: 2, kind: input, shape index: {}]
  %s3 = inlined_call_operand.<no memory space> [shape: f32[1], index: 3, kind: input, shape index: {}]
  %s4 = inlined_call_operand.hbm [shape: f32[2,8,128], index: 4, kind: output, shape index: {}]
  %s5 = sld [smem:[#allocation0]]
  $region53: #{cross_out_layer_2.3} parent=0
    _
  %s7 = ssub.s32 1, %s5
  %s8 = scalar_select 0, %s7, %s5
  %9 = sst [smem:[#allocation2]] %s3
  $region1: #{cross_out_layer_2.3} parent=0
    #allocation3 [shape = 'u8[512]{0}', space=smem, size = 0x200, scoped, tag = 'input window, operand 2, single buffered']
    #allocation4 [shape = 's32[2]{0}', space=sflag, size = 0x8, scoped, tag = 'scoped memory for cross_out_layer_2.3']
    #allocation5 [shape = 's32[2]{0}', space=sflag, size = 0x8, scoped, tag = 'scoped memory for cross_out_layer_2.3']
    #allocation6 [shape = 'u8[8192]{0}', space=vmem, size = 0x2000, scoped, tag = 'output window, operand 0']
    %10 = vsyncpa [#allocation5], 0
    %11 = vsyncpa [#allocation4], 0
    %s12 = scalar_lea.sflag [#allocation4], 1
    %13 = vsyncpa %s12, 0
    loop: start=0, step=1, limit=4
    $region2: #{cross_out_layer_2.3} parent=1 // loop_pre_header
      _
    $region3: #{cross_out_layer_2.3} parent=1 // loop_header
      %s15 = sphi 0, %s19
      %p16 = scmp.ge.s32.totalorder %s15, 4
      %s22 = sphi 0, %s41
      %s23 = sphi 0, %s37
      %s24 = sphi 0, %s33
      %s25 = sphi 0, %s22
      %s26 = sphi 0, %s23
      %s27 = sphi 0, %s24
      %s28 = sphi 0, %s25
      %s29 = sphi 0, %s26
      %s30 = sphi 0, %s27
      %s46 = sphi 0, %s48
      %s49 = sphi 0, %s46
      %s50 = sphi 0, %s49
      %s66 = sphi 0, %s50
      %s74 = sphi 0, %s76
      %s77 = sphi 0, %s74
      %s78 = sphi 0, %s77
      %s94 = sphi 0, %s78
      %s98 = sphi 0, %s98
      %s100 = sphi 0, %s98
      %s101 = sphi 0, %s100
      %s115 = sphi 0, %s101
      %s119 = sphi 0, %s119
      %s121 = sphi 0, %s119
      %s122 = sphi 0, %s121
      %s136 = sphi 0, %s122
      %s146 = sphi 0, %s148
      %s149 = sphi 0, %s146
      %s150 = sphi 0, %s149
      %s166 = sphi 0, %s150
    $region4: #{cross_out_layer_2.3} parent=1 // loop_header_branch
      %18 = sbr.rel (%p16) target = $region8
    $region5: #{cross_out_layer_2.3} parent=1 // loop_body
      %s20 = ssub.s32 %s15, 1
      %s21 = ssub.s32 %s15, 2
      %s31 = sadd.s32 1, %s24
      %p32 = scmp.ge.s32.totalorder %s31, 1
      %s33 = scalar_select %p32, 0, %s31
      %s34 = sadd.s32 1, %s23
      %s35 = scalar_select %p32, %s34, %s23
      %p36 = scmp.ge.s32.totalorder %s35, 1
      %s37 = scalar_select %p36, 0, %s35
      %s38 = sadd.s32 1, %s22
      %s39 = scalar_select %p36, %s38, %s22
      %p40 = scmp.ge.s32.totalorder %s39, 2
      %s41 = scalar_select %p40, 0, %s39
      %s42 = ssub.s32 %s22, %s41
      %s43 = ssub.s32 %s24, %s33
      %s44 = sor.u32 %s42, %s43
      %p45 = scmp.eq.s32.totalorder %s44, 0
      %s47 = sadd.s32 %s46, 1
      %s48 = scalar_select %p45, %s46, %s47
      %p51 = pneg %p45
      %p52 = scmp.eq.s32.totalorder %s15, 1
      %p53 = por %p51, %p52
      %p54 = scmp.ne.s32.totalorder %s46, %s49
      %p55 = scmp.eq.s32.totalorder %s15, 0
      %p56 = por %p54, %p55
      %p57 = scmp.ne.s32.totalorder %s46, %s49
      %p58 = scmp.eq.s32.totalorder %s20, 1
      %p59 = por %p57, %p58
      %p60 = scmp.ne.s32.totalorder %s49, %s50
      %p61 = scmp.eq.s32.totalorder %s20, 0
      %p62 = por %p60, %p61
      %p63 = scmp.ne.s32.totalorder %s49, %s50
      %p64 = scmp.eq.s32.totalorder %s21, 1
      %p65 = por %p63, %p64
      %p67 = scmp.ne.s32.totalorder %s50, %s66
      %p68 = scmp.eq.s32.totalorder %s21, 0
      %p69 = por %p67, %p68
      %s70 = ssub.s32 %s22, %s41
      %s71 = ssub.s32 %s23, %s37
      %s72 = sor.u32 %s70, %s71
      %p73 = scmp.eq.s32.totalorder %s72, 0
      %s75 = sadd.s32 %s74, 1
      %s76 = scalar_select %p73, %s74, %s75
      %p79 = pneg %p73
      %p80 = scmp.eq.s32.totalorder %s15, 1
      %p81 = por %p79, %p80
      %p82 = scmp.ne.s32.totalorder %s74, %s77
      %p83 = scmp.eq.s32.totalorder %s15, 0
      %p84 = por %p82, %p83
      %p85 = scmp.ne.s32.totalorder %s74, %s77
      %p86 = scmp.eq.s32.totalorder %s20, 1
      %p87 = por %p85, %p86
      %p88 = scmp.ne.s32.totalorder %s77, %s78
      %p89 = scmp.eq.s32.totalorder %s20, 0
      %p90 = por %p88, %p89
      %p91 = scmp.ne.s32.totalorder %s77, %s78
      %p92 = scmp.eq.s32.totalorder %s21, 1
      %p93 = por %p91, %p92
      %p95 = scmp.ne.s32.totalorder %s78, %s94
      %p96 = scmp.eq.s32.totalorder %s21, 0
      %p97 = por %p95, %p96
      %s99 = sadd.s32 %s98, 1
      %p102 = scmp.eq.s32.totalorder %s15, 1
      %p103 = scmp.ne.s32.totalorder %s98, %s100
      %p104 = scmp.eq.s32.totalorder %s15, 0
      %p105 = por %p103, %p104
      %p106 = scmp.ne.s32.totalorder %s98, %s100
      %p107 = scmp.eq.s32.totalorder %s20, 1
      %p108 = por %p106, %p107
      %p109 = scmp.ne.s32.totalorder %s100, %s101
      %p110 = scmp.eq.s32.totalorder %s20, 0
      %p111 = por %p109, %p110
      %p112 = scmp.ne.s32.totalorder %s100, %s101
      %p113 = scmp.eq.s32.totalorder %s21, 1
      %p114 = por %p112, %p113
      %p116 = scmp.ne.s32.totalorder %s101, %s115
      %p117 = scmp.eq.s32.totalorder %s21, 0
      %p118 = por %p116, %p117
      %s120 = sadd.s32 %s119, 1
      %p123 = scmp.eq.s32.totalorder %s15, 1
      %p124 = scmp.ne.s32.totalorder %s119, %s121
      %p125 = scmp.eq.s32.totalorder %s15, 0
      %p126 = por %p124, %p125
      %p127 = scmp.ne.s32.totalorder %s119, %s121
      %p128 = scmp.eq.s32.totalorder %s20, 1
      %p129 = por %p127, %p128
      %p130 = scmp.ne.s32.totalorder %s121, %s122
      %p131 = scmp.eq.s32.totalorder %s20, 0
      %p132 = por %p130, %p131
      %p133 = scmp.ne.s32.totalorder %s121, %s122
      %p134 = scmp.eq.s32.totalorder %s21, 1
      %p135 = por %p133, %p134
      %p137 = scmp.ne.s32.totalorder %s122, %s136
      %p138 = scmp.eq.s32.totalorder %s21, 0
      %p139 = por %p137, %p138
      %s140 = ssub.s32 %s22, %s41
      %s141 = ssub.s32 %s24, %s33
      %s142 = sor.u32 %s140, %s141
      %s143 = ssub.s32 %s23, %s37
      %s144 = sor.u32 %s142, %s143
      %p145 = scmp.eq.s32.totalorder %s144, 0
      %s147 = sadd.s32 %s146, 1
      %s148 = scalar_select %p145, %s146, %s147
      %p151 = pneg %p145
      %p152 = scmp.eq.s32.totalorder %s15, 1
      %p153 = por %p151, %p152
      %p154 = scmp.ne.s32.totalorder %s146, %s149
      %p155 = scmp.eq.s32.totalorder %s15, 0
      %p156 = por %p154, %p155
      %p157 = scmp.ne.s32.totalorder %s146, %s149
      %p158 = scmp.eq.s32.totalorder %s20, 1
      %p159 = por %p157, %p158
      %p160 = scmp.ne.s32.totalorder %s149, %s150
      %p161 = scmp.eq.s32.totalorder %s20, 0
      %p162 = por %p160, %p161
      %p163 = scmp.ne.s32.totalorder %s149, %s150
      %p164 = scmp.eq.s32.totalorder %s21, 1
      %p165 = por %p163, %p164
      %p167 = scmp.ne.s32.totalorder %s150, %s166
      %p168 = scmp.eq.s32.totalorder %s21, 0
      %p169 = por %p167, %p168
      %p170 = scmp.le.s32.totalorder 1, %s15
      %p171 = scmp.lt.s32.totalorder %s15, 3
      %p172 = pnand %p170, %p171
      %p173 = pneg %p172
      // Predicated region
      $region9: #{cross_out_layer_2.3} parent=5 // pred_check
        _
      $region10: #{cross_out_layer_2.3} parent=5 // pred_check_branch
        %175 = sbr.rel (%p172) target = $region12
      $region11: #{cross_out_layer_2.3} parent=5 // pred_region
        %s176 = ssub.s32 %s15, 1
        // Predicated region
        $region13: #{cross_out_layer_2.3} parent=11 // pred_check
          %p177 = pneg %p111
        $region14: #{cross_out_layer_2.3} parent=11 // pred_check_branch
          %179 = sbr.rel (%p177) target = $region16
        $region15: #{cross_out_layer_2.3} parent=11 // pred_region
          %s181 = ssub.s32 16, 16
          %182 = vsyncadd [#allocation5], %s181
          %s184 = sshll.u32 %s2, 4
          %s185 = int_to_ptr.vmem [resolvable:$true] %s184
          %187 = dma.vmem_to_smem %s185, 16, [#allocation3], [#allocation5]
        $region16: #{cross_out_layer_2.3} parent=11 // pred_fallthru
          _
        // Predicated region
        $region17: #{cross_out_layer_2.3} parent=11 // pred_check
          %p188 = pneg %p132
        $region18: #{cross_out_layer_2.3} parent=11 // pred_check_branch
          %190 = sbr.rel (%p188) target = $region20
        $region19: #{cross_out_layer_2.3} parent=11 // pred_region
          _
        $region20: #{cross_out_layer_2.3} parent=11 // pred_fallthru
          _
      $region12: #{cross_out_layer_2.3} parent=5 // pred_fallthru
        _
      %p191 = scmp.lt.s32.totalorder %s15, 2
      // Predicated region
      $region21: #{cross_out_layer_2.3} parent=5 // pred_check
        %p192 = pneg %p191
      $region22: #{cross_out_layer_2.3} parent=5 // pred_check_branch
        %194 = sbr.rel (%p192) target = $region24
      $region23: #{cross_out_layer_2.3} parent=5 // pred_region
        // Predicated region
        $region25: #{cross_out_layer_2.3} parent=23 // pred_check
          %p195 = pneg %p56
        $region26: #{cross_out_layer_2.3} parent=23 // pred_check_branch
          %197 = sbr.rel (%p195) target = $region28
        $region27: #{cross_out_layer_2.3} parent=23 // pred_region
          %p198 = scmp.lt.s32.totalorder %s22, 1
          %s199 = scalar_select %p198, %s22, 1
          %p200 = scmp.lt.s32.totalorder %s24, 0
          %s201 = scalar_select %p200, %s24, 0
          %s202 = sadd.s32 %s201, %s199
          %s203 = smul.addr %s202, 8
          %s204 = scalar_lea.vmem %s0, %s203
        $region28: #{cross_out_layer_2.3} parent=23 // pred_fallthru
          _
        // Predicated region
        $region29: #{cross_out_layer_2.3} parent=23 // pred_check
          %p205 = pneg %p84
        $region30: #{cross_out_layer_2.3} parent=23 // pred_check_branch
          %207 = sbr.rel (%p205) target = $region32
        $region31: #{cross_out_layer_2.3} parent=23 // pred_region
          %p208 = scmp.lt.s32.totalorder %s22, 1
          %s209 = scalar_select %p208, %s22, 1
          %p210 = scmp.lt.s32.totalorder %s23, 0
          %s211 = scalar_select %p210, %s23, 0
          %s212 = smul.addr %s209, 4
          %s213 = sadd.s32 %s211, %s212
          %s214 = smul.addr %s213, 8
          %s215 = scalar_lea.vmem %s1, %s214
        $region32: #{cross_out_layer_2.3} parent=23 // pred_fallthru
          _
      $region24: #{cross_out_layer_2.3} parent=5 // pred_fallthru
        _
      %p216 = scmp.le.s32.totalorder 1, %s15
      %p217 = scmp.lt.s32.totalorder %s15, 3
      %p218 = pnand %p216, %p217
      %p219 = pneg %p218
      // Predicated region
      $region33: #{cross_out_layer_2.3} parent=5 // pred_check
        _
      $region34: #{cross_out_layer_2.3} parent=5 // pred_check_branch
        %221 = sbr.rel (%p218) target = $region36
      $region35: #{cross_out_layer_2.3} parent=5 // pred_region
        %s222 = ssub.s32 %s15, 1
        // Predicated region
        $region37: #{cross_out_layer_2.3} parent=35 // pred_check
          %p223 = pneg %p111
        $region38: #{cross_out_layer_2.3} parent=35 // pred_check_branch
          %225 = sbr.rel (%p223) target = $region40
        $region39: #{cross_out_layer_2.3} parent=35 // pred_region
          %226 = dma.done [#allocation5], 16
        $region40: #{cross_out_layer_2.3} parent=35 // pred_fallthru
          _
        %227 = sfence
        %p228 = scmp.lt.s32.totalorder %s25, 1
        %s229 = scalar_select %p228, %s25, 1
        %p230 = scmp.lt.s32.totalorder %s27, 0
        %s231 = scalar_select %p230, %s27, 0
        %s232 = sadd.s32 %s231, %s229
        %s233 = smul.addr %s232, 8
        %s234 = scalar_lea.vmem %s0, %s233
        %p235 = pneg %p62
        %p236 = pneg %p59
        %p237 = scmp.lt.s32.totalorder %s25, 1
        %s238 = scalar_select %p237, %s25, 1
        %p239 = scmp.lt.s32.totalorder %s26, 0
        %s240 = scalar_select %p239, %s26, 0
        %s241 = smul.addr %s238, 4
        %s242 = sadd.s32 %s240, %s241
        %s243 = smul.addr %s242, 8
        %s244 = scalar_lea.vmem %s1, %s243
        %p245 = pneg %p90
        %p246 = pneg %p87
        %p247 = pneg %p111
        %p248 = pneg %p108
        %p249 = pneg %p132
        %p250 = pneg %p129
        %p251 = pneg %p162
        %p252 = pneg %p159
        %s253 = sand.u32 %s149, 1
        %s254 = scalar_lea.sflag [#allocation4], %s253
        %s255 = sand.u32 %s149, 1
        %s256 = smul.addr %s255, 8
        %s257 = scalar_lea.vmem [#allocation6], %s256
        %p258 = scmp.lt.s32.totalorder %s25, 1
        %s259 = scalar_select %p258, %s25, 1
        %p260 = scmp.lt.s32.totalorder %s27, 0
        %s261 = scalar_select %p260, %s27, 0
        %s262 = sadd.s32 %s261, %s259
        %s263 = smul.addr %s262, 8
        %s264 = scalar_lea.vmem %s0, %s263
        %p265 = scmp.lt.s32.totalorder %s25, 1
        %s266 = scalar_select %p265, %s25, 1
        %p267 = scmp.lt.s32.totalorder %s26, 0
        %s268 = scalar_select %p267, %s26, 0
        %s269 = smul.addr %s266, 4
        %s270 = sadd.s32 %s268, %s269
        %s271 = smul.addr %s270, 8
        %s272 = scalar_lea.vmem %s1, %s271
        %s273 = sld [smem:[#allocation2]]
        %v274 = vstv %s273
        %v275 = vld [vmem:[%s264] sm:$0xff]
        %v276 = vld [vmem:[%s272] sm:$0x1]
        %278 = vset.pattern.permute.xlu0 0
        %279 = vperm.xlu0 %278, %v275
        %v280 = vpop.permute.xlu0 %279
        %v282 = vlaneseq
        %v283 = vshrl.u32 %v282, 7
        %v284 = vsub.s32 0, %v283
        %v285 = vrot.slane %v276, %v284
        %v286 = vadd.f32 %v280, %v285
        %s287 = sld [smem:[#allocation3]]
        %v288 = vmul.f32 %v286, 0.5
        %v289 = vmul.f32 %v286, 0.70710677
        %v290 = verf.f32.pop %v289
        %v291 = vadd.f32 %v290, 1.0
        %v292 = vmul.f32 %v288, %v291
        %v293 = vstv %s287
        %v294 = vmul.f32 %v293, %v292
        %v295 = vadd.f32 %v274, %v294
        %v296 = vld [vmem:[%s272 + $0x1] sm:$0x1]
        %297 = vset.pattern.permute.xlu0 1
        %298 = vperm.xlu0 %297, %v275
        %v299 = vpop.permute.xlu0 %298
        %v301 = vlaneseq
        %v302 = vshrl.u32 %v301, 7
        %v303 = vsub.s32 0, %v302
        %v304 = vrot.slane %v296, %v303
        %v305 = vadd.f32 %v299, %v304
        %s306 = sld [smem:[#allocation3 + $0x1]]
        %v307 = vmul.f32 %v305, 0.5
        %v308 = vmul.f32 %v305, 0.70710677
        %v309 = verf.f32.pop %v308
        %v310 = vadd.f32 %v309, 1.0
        %v311 = vmul.f32 %v307, %v310
        %v312 = vstv %s306
        %v313 = vmul.f32 %v312, %v311
        %v314 = vadd.f32 %v295, %v313
        %v315 = vld [vmem:[%s272 + $0x2] sm:$0x1]
        %316 = vset.pattern.permute.xlu0 2
        %317 = vperm.xlu0 %316, %v275
        %v318 = vpop.permute.xlu0 %317
        %v320 = vlaneseq
        %v321 = vshrl.u32 %v320, 7
        %v322 = vsub.s32 0, %v321
        %v323 = vrot.slane %v315, %v322
        %v324 = vadd.f32 %v318, %v323
        %s325 = sld [smem:[#allocation3 + $0x2]]
        %v326 = vmul.f32 %v324, 0.5
        %v327 = vmul.f32 %v324, 0.70710677
        %v328 = verf.f32.pop %v327
        %v329 = vadd.f32 %v328, 1.0
        %v330 = vmul.f32 %v326, %v329
        %v331 = vstv %s325
        %v332 = vmul.f32 %v331, %v330
        %v333 = vadd.f32 %v314, %v332
        %v334 = vld [vmem:[%s272 + $0x3] sm:$0x1]
        %335 = vset.pattern.permute.xlu0 3
        %336 = vperm.xlu0 %335, %v275
        %v337 = vpop.permute.xlu0 %336
        %v339 = vlaneseq
        %v340 = vshrl.u32 %v339, 7
        %v341 = vsub.s32 0, %v340
        %v342 = vrot.slane %v334, %v341
        %v343 = vadd.f32 %v337, %v342
        %s344 = sld [smem:[#allocation3 + $0x3]]
        %v345 = vmul.f32 %v343, 0.5
        %v346 = vmul.f32 %v343, 0.70710677
        %v347 = verf.f32.pop %v346
        %v348 = vadd.f32 %v347, 1.0
        %v349 = vmul.f32 %v345, %v348
        %v350 = vstv %s344
        %v351 = vmul.f32 %v350, %v349
        %v352 = vadd.f32 %v333, %v351
        %v353 = vld [vmem:[%s272 + $0x4] sm:$0x1]
        %354 = vset.pattern.permute.xlu0 4
        %355 = vperm.xlu0 %354, %v275
        %v356 = vpop.permute.xlu0 %355
        %v358 = vlaneseq
        %v359 = vshrl.u32 %v358, 7
        %v360 = vsub.s32 0, %v359
        %v361 = vrot.slane %v353, %v360
        %v362 = vadd.f32 %v356, %v361
        %s363 = sld [smem:[#allocation3 + $0x4]]
        %v364 = vmul.f32 %v362, 0.5
        %v365 = vmul.f32 %v362, 0.70710677
        %v366 = verf.f32.pop %v365
        %v367 = vadd.f32 %v366, 1.0
        %v368 = vmul.f32 %v364, %v367
        %v369 = vstv %s363
        %v370 = vmul.f32 %v369, %v368
        %v371 = vadd.f32 %v352, %v370
        %v372 = vld [vmem:[%s272 + $0x5] sm:$0x1]
        %373 = vset.pattern.permute.xlu0 5
        %374 = vperm.xlu0 %373, %v275
        %v375 = vpop.permute.xlu0 %374
        %v377 = vlaneseq
        %v378 = vshrl.u32 %v377, 7
        %v379 = vsub.s32 0, %v378
        %v380 = vrot.slane %v372, %v379
        %v381 = vadd.f32 %v375, %v380
        %s382 = sld [smem:[#allocation3 + $0x5]]
        %v383 = vmul.f32 %v381, 0.5
        %v384 = vmul.f32 %v381, 0.70710677
        %v385 = verf.f32.pop %v384
        %v386 = vadd.f32 %v385, 1.0
        %v387 = vmul.f32 %v383, %v386
        %v388 = vstv %s382
        %v389 = vmul.f32 %v388, %v387
        %v390 = vadd.f32 %v371, %v389
        %v391 = vld [vmem:[%s272 + $0x6] sm:$0x1]
        %392 = vset.pattern.permute.xlu0 6
        %393 = vperm.xlu0 %392, %v275
        %v394 = vpop.permute.xlu0 %393
        %v396 = vlaneseq
        %v397 = vshrl.u32 %v396, 7
        %v398 = vsub.s32 0, %v397
        %v399 = vrot.slane %v391, %v398
        %v400 = vadd.f32 %v394, %v399
        %s401 = sld [smem:[#allocation3 + $0x6]]
        %v402 = vmul.f32 %v400, 0.5
        %v403 = vmul.f32 %v400, 0.70710677
        %v404 = verf.f32.pop %v403
        %v405 = vadd.f32 %v404, 1.0
        %v406 = vmul.f32 %v402, %v405
        %v407 = vstv %s401
        %v408 = vmul.f32 %v407, %v406
        %v409 = vadd.f32 %v390, %v408
        %v410 = vld [vmem:[%s272 + $0x7] sm:$0x1]
        %411 = vset.pattern.permute.xlu0 7
        %412 = vperm.xlu0 %411, %v275
        %v413 = vpop.permute.xlu0 %412
        %v415 = vlaneseq
        %v416 = vshrl.u32 %v415, 7
        %v417 = vsub.s32 0, %v416
        %v418 = vrot.slane %v410, %v417
        %v419 = vadd.f32 %v413, %v418
        %s420 = sld [smem:[#allocation3 + $0x7]]
        %v421 = vmul.f32 %v419, 0.5
        %v422 = vmul.f32 %v419, 0.70710677
        %v423 = verf.f32.pop %v422
        %v424 = vadd.f32 %v423, 1.0
        %v425 = vmul.f32 %v421, %v424
        %v426 = vstv %s420
        %v427 = vmul.f32 %v426, %v425
        %v428 = vadd.f32 %v409, %v427
        %v429 = vld [vmem:[%s272 + $0x8] sm:$0x1]
        %430 = vset.pattern.permute.xlu0 8
        %431 = vperm.xlu0 %430, %v275
        %v432 = vpop.permute.xlu0 %431
        %v434 = vlaneseq
        %v435 = vshrl.u32 %v434, 7
        %v436 = vsub.s32 0, %v435
        %v437 = vrot.slane %v429, %v436
        %v438 = vadd.f32 %v432, %v437
        %s439 = sld [smem:[#allocation3 + $0x8]]
        %v440 = vmul.f32 %v438, 0.5
        %v441 = vmul.f32 %v438, 0.70710677
        %v442 = verf.f32.pop %v441
        %v443 = vadd.f32 %v442, 1.0
        %v444 = vmul.f32 %v440, %v443
        %v445 = vstv %s439
        %v446 = vmul.f32 %v445, %v444
        %v447 = vadd.f32 %v428, %v446
        %v448 = vld [vmem:[%s272 + $0x9] sm:$0x1]
        %449 = vset.pattern.permute.xlu0 9
        %450 = vperm.xlu0 %449, %v275
        %v451 = vpop.permute.xlu0 %450
        %v453 = vlaneseq
        %v454 = vshrl.u32 %v453, 7
        %v455 = vsub.s32 0, %v454
        %v456 = vrot.slane %v448, %v455
        %v457 = vadd.f32 %v451, %v456
        %s458 = sld [smem:[#allocation3 + $0x9]]
        %v459 = vmul.f32 %v457, 0.5
        %v460 = vmul.f32 %v457, 0.70710677
        %v461 = verf.f32.pop %v460
        %v462 = vadd.f32 %v461, 1.0
        %v463 = vmul.f32 %v459, %v462
        %v464 = vstv %s458
        %v465 = vmul.f32 %v464, %v463
        %v466 = vadd.f32 %v447, %v465
        %v467 = vld [vmem:[%s272 + $0xa] sm:$0x1]
        %468 = vset.pattern.permute.xlu0 10
        %469 = vperm.xlu0 %468, %v275
        %v470 = vpop.permute.xlu0 %469
        %v472 = vlaneseq
        %v473 = vshrl.u32 %v472, 7
        %v474 = vsub.s32 0, %v473
        %v475 = vrot.slane %v467, %v474
        %v476 = vadd.f32 %v470, %v475
        %s477 = sld [smem:[#allocation3 + $0xa]]
        %v478 = vmul.f32 %v476, 0.5
        %v479 = vmul.f32 %v476, 0.70710677
        %v480 = verf.f32.pop %v479
        %v481 = vadd.f32 %v480, 1.0
        %v482 = vmul.f32 %v478, %v481
        %v483 = vstv %s477
        %v484 = vmul.f32 %v483, %v482
        %v485 = vadd.f32 %v466, %v484
        %v486 = vld [vmem:[%s272 + $0xb] sm:$0x1]
        %487 = vset.pattern.permute.xlu0 11
        %488 = vperm.xlu0 %487, %v275
        %v489 = vpop.permute.xlu0 %488
        %v491 = vlaneseq
        %v492 = vshrl.u32 %v491, 7
        %v493 = vsub.s32 0, %v492
        %v494 = vrot.slane %v486, %v493
        %v495 = vadd.f32 %v489, %v494
        %s496 = sld [smem:[#allocation3 + $0xb]]
        %v497 = vmul.f32 %v495, 0.5
        %v498 = vmul.f32 %v495, 0.70710677
        %v499 = verf.f32.pop %v498
        %v500 = vadd.f32 %v499, 1.0
        %v501 = vmul.f32 %v497, %v500
        %v502 = vstv %s496
        %v503 = vmul.f32 %v502, %v501
        %v504 = vadd.f32 %v485, %v503
        %v505 = vld [vmem:[%s272 + $0xc] sm:$0x1]
        %506 = vset.pattern.permute.xlu0 12
        %507 = vperm.xlu0 %506, %v275
        %v508 = vpop.permute.xlu0 %507
        %v510 = vlaneseq
        %v511 = vshrl.u32 %v510, 7
        %v512 = vsub.s32 0, %v511
        %v513 = vrot.slane %v505, %v512
        %v514 = vadd.f32 %v508, %v513
        %s515 = sld [smem:[#allocation3 + $0xc]]
        %v516 = vmul.f32 %v514, 0.5
        %v517 = vmul.f32 %v514, 0.70710677
        %v518 = verf.f32.pop %v517
        %v519 = vadd.f32 %v518, 1.0
        %v520 = vmul.f32 %v516, %v519
        %v521 = vstv %s515
        %v522 = vmul.f32 %v521, %v520
        %v523 = vadd.f32 %v504, %v522
        %v524 = vld [vmem:[%s272 + $0xd] sm:$0x1]
        %525 = vset.pattern.permute.xlu0 13
        %526 = vperm.xlu0 %525, %v275
        %v527 = vpop.permute.xlu0 %526
        %v529 = vlaneseq
        %v530 = vshrl.u32 %v529, 7
        %v531 = vsub.s32 0, %v530
        %v532 = vrot.slane %v524, %v531
        %v533 = vadd.f32 %v527, %v532
        %s534 = sld [smem:[#allocation3 + $0xd]]
        %v535 = vmul.f32 %v533, 0.5
        %v536 = vmul.f32 %v533, 0.70710677
        %v537 = verf.f32.pop %v536
        %v538 = vadd.f32 %v537, 1.0
        %v539 = vmul.f32 %v535, %v538
        %v540 = vstv %s534
        %v541 = vmul.f32 %v540, %v539
        %v542 = vadd.f32 %v523, %v541
        %v543 = vld [vmem:[%s272 + $0xe] sm:$0x1]
        %544 = vset.pattern.permute.xlu0 14
        %545 = vperm.xlu0 %544, %v275
        %v546 = vpop.permute.xlu0 %545
        %v548 = vlaneseq
        %v549 = vshrl.u32 %v548, 7
        %v550 = vsub.s32 0, %v549
        %v551 = vrot.slane %v543, %v550
        %v552 = vadd.f32 %v546, %v551
        %s553 = sld [smem:[#allocation3 + $0xe]]
        %v554 = vmul.f32 %v552, 0.5
        %v555 = vmul.f32 %v552, 0.70710677
        %v556 = verf.f32.pop %v555
        %v557 = vadd.f32 %v556, 1.0
        %v558 = vmul.f32 %v554, %v557
        %v559 = vstv %s553
        %v560 = vmul.f32 %v559, %v558
        %v561 = vadd.f32 %v542, %v560
        %v562 = vld [vmem:[%s272 + $0xf] sm:$0x1]
        %563 = vset.pattern.permute.xlu0 15
        %564 = vperm.xlu0 %563, %v275
        %v565 = vpop.permute.xlu0 %564
        %v567 = vlaneseq
        %v568 = vshrl.u32 %v567, 7
        %v569 = vsub.s32 0, %v568
        %v570 = vrot.slane %v562, %v569
        %v571 = vadd.f32 %v565, %v570
        %s572 = sld [smem:[#allocation3 + $0xf]]
        %v573 = vmul.f32 %v571, 0.5
        %v574 = vmul.f32 %v571, 0.70710677
        %v575 = verf.f32.pop %v574
        %v576 = vadd.f32 %v575, 1.0
        %v577 = vmul.f32 %v573, %v576
        %v578 = vstv %s572
        %v579 = vmul.f32 %v578, %v577
        %v580 = vadd.f32 %v561, %v579
        %v581 = vld [vmem:[%s272 + $0x10] sm:$0x1]
        %582 = vset.pattern.permute.xlu0 16
        %583 = vperm.xlu0 %582, %v275
        %v584 = vpop.permute.xlu0 %583
        %v586 = vlaneseq
        %v587 = vshrl.u32 %v586, 7
        %v588 = vsub.s32 0, %v587
        %v589 = vrot.slane %v581, %v588
        %v590 = vadd.f32 %v584, %v589
        %s591 = sld [smem:[#allocation3 + $0x10]]
        %v592 = vmul.f32 %v590, 0.5
        %v593 = vmul.f32 %v590, 0.70710677
        %v594 = verf.f32.pop %v593
        %v595 = vadd.f32 %v594, 1.0
        %v596 = vmul.f32 %v592, %v595
        %v597 = vstv %s591
        %v598 = vmul.f32 %v597, %v596
        %v599 = vadd.f32 %v580, %v598
        %v600 = vld [vmem:[%s272 + $0x11] sm:$0x1]
        %601 = vset.pattern.permute.xlu0 17
        %602 = vperm.xlu0 %601, %v275
        %v603 = vpop.permute.xlu0 %602
        %v605 = vlaneseq
        %v606 = vshrl.u32 %v605, 7
        %v607 = vsub.s32 0, %v606
        %v608 = vrot.slane %v600, %v607
        %v609 = vadd.f32 %v603, %v608
        %s610 = sld [smem:[#allocation3 + $0x11]]
        %v611 = vmul.f32 %v609, 0.5
        %v612 = vmul.f32 %v609, 0.70710677
        %v613 = verf.f32.pop %v612
        %v614 = vadd.f32 %v613, 1.0
        %v615 = vmul.f32 %v611, %v614
        %v616 = vstv %s610
        %v617 = vmul.f32 %v616, %v615
        %v618 = vadd.f32 %v599, %v617
        %v619 = vld [vmem:[%s272 + $0x12] sm:$0x1]
        %620 = vset.pattern.permute.xlu0 18
        %621 = vperm.xlu0 %620, %v275
        %v622 = vpop.permute.xlu0 %621
        %v624 = vlaneseq
        %v625 = vshrl.u32 %v624, 7
        %v626 = vsub.s32 0, %v625
        %v627 = vrot.slane %v619, %v626
        %v628 = vadd.f32 %v622, %v627
        %s629 = sld [smem:[#allocation3 + $0x12]]
        %v630 = vmul.f32 %v628, 0.5
        %v631 = vmul.f32 %v628, 0.70710677
        %v632 = verf.f32.pop %v631
        %v633 = vadd.f32 %v632, 1.0
        %v634 = vmul.f32 %v630, %v633
        %v635 = vstv %s629
        %v636 = vmul.f32 %v635, %v634
        %v637 = vadd.f32 %v618, %v636
        %v638 = vld [vmem:[%s272 + $0x13] sm:$0x1]
        %639 = vset.pattern.permute.xlu0 19
        %640 = vperm.xlu0 %639, %v275
        %v641 = vpop.permute.xlu0 %640
        %v643 = vlaneseq
        %v644 = vshrl.u32 %v643, 7
        %v645 = vsub.s32 0, %v644
        %v646 = vrot.slane %v638, %v645
        %v647 = vadd.f32 %v641, %v646
        %s648 = sld [smem:[#allocation3 + $0x13]]
        %v649 = vmul.f32 %v647, 0.5
        %v650 = vmul.f32 %v647, 0.70710677
        %v651 = verf.f32.pop %v650
        %v652 = vadd.f32 %v651, 1.0
        %v653 = vmul.f32 %v649, %v652
        %v654 = vstv %s648
        %v655 = vmul.f32 %v654, %v653
        %v656 = vadd.f32 %v637, %v655
        %v657 = vld [vmem:[%s272 + $0x14] sm:$0x1]
        %658 = vset.pattern.permute.xlu0 20
        %659 = vperm.xlu0 %658, %v275
        %v660 = vpop.permute.xlu0 %659
        %v662 = vlaneseq
        %v663 = vshrl.u32 %v662, 7
        %v664 = vsub.s32 0, %v663
        %v665 = vrot.slane %v657, %v664
        %v666 = vadd.f32 %v660, %v665
        %s667 = sld [smem:[#allocation3 + $0x14]]
        %v668 = vmul.f32 %v666, 0.5
        %v669 = vmul.f32 %v666, 0.70710677
        %v670 = verf.f32.pop %v669
        %v671 = vadd.f32 %v670, 1.0
        %v672 = vmul.f32 %v668, %v671
        %v673 = vstv %s667
        %v674 = vmul.f32 %v673, %v672
        %v675 = vadd.f32 %v656, %v674
        %v676 = vld [vmem:[%s272 + $0x15] sm:$0x1]
        %677 = vset.pattern.permute.xlu0 21
        %678 = vperm.xlu0 %677, %v275
        %v679 = vpop.permute.xlu0 %678
        %v681 = vlaneseq
        %v682 = vshrl.u32 %v681, 7
        %v683 = vsub.s32 0, %v682
        %v684 = vrot.slane %v676, %v683
        %v685 = vadd.f32 %v679, %v684
        %s686 = sld [smem:[#allocation3 + $0x15]]
        %v687 = vmul.f32 %v685, 0.5
        %v688 = vmul.f32 %v685, 0.70710677
        %v689 = verf.f32.pop %v688
        %v690 = vadd.f32 %v689, 1.0
        %v691 = vmul.f32 %v687, %v690
        %v692 = vstv %s686
        %v693 = vmul.f32 %v692, %v691
        %v694 = vadd.f32 %v675, %v693
        %v695 = vld [vmem:[%s272 + $0x16] sm:$0x1]
        %696 = vset.pattern.permute.xlu0 22
        %697 = vperm.xlu0 %696, %v275
        %v698 = vpop.permute.xlu0 %697
        %v700 = vlaneseq
        %v701 = vshrl.u32 %v700, 7
        %v702 = vsub.s32 0, %v701
        %v703 = vrot.slane %v695, %v702
        %v704 = vadd.f32 %v698, %v703
        %s705 = sld [smem:[#allocation3 + $0x16]]
        %v706 = vmul.f32 %v704, 0.5
        %v707 = vmul.f32 %v704, 0.70710677
        %v708 = verf.f32.pop %v707
        %v709 = vadd.f32 %v708, 1.0
        %v710 = vmul.f32 %v706, %v709
        %v711 = vstv %s705
        %v712 = vmul.f32 %v711, %v710
        %v713 = vadd.f32 %v694, %v712
        %v714 = vld [vmem:[%s272 + $0x17] sm:$0x1]
        %715 = vset.pattern.permute.xlu0 23
        %716 = vperm.xlu0 %715, %v275
        %v717 = vpop.permute.xlu0 %716
        %v719 = vlaneseq
        %v720 = vshrl.u32 %v719, 7
        %v721 = vsub.s32 0, %v720
        %v722 = vrot.slane %v714, %v721
        %v723 = vadd.f32 %v717, %v722
        %s724 = sld [smem:[#allocation3 + $0x17]]
        %v725 = vmul.f32 %v723, 0.5
        %v726 = vmul.f32 %v723, 0.70710677
        %v727 = verf.f32.pop %v726
        %v728 = vadd.f32 %v727, 1.0
        %v729 = vmul.f32 %v725, %v728
        %v730 = vstv %s724
        %v731 = vmul.f32 %v730, %v729
        %v732 = vadd.f32 %v713, %v731
        %v733 = vld [vmem:[%s272 + $0x18] sm:$0x1]
        %734 = vset.pattern.permute.xlu0 24
        %735 = vperm.xlu0 %734, %v275
        %v736 = vpop.permute.xlu0 %735
        %v738 = vlaneseq
        %v739 = vshrl.u32 %v738, 7
        %v740 = vsub.s32 0, %v739
        %v741 = vrot.slane %v733, %v740
        %v742 = vadd.f32 %v736, %v741
        %s743 = sld [smem:[#allocation3 + $0x18]]
        %v744 = vmul.f32 %v742, 0.5
        %v745 = vmul.f32 %v742, 0.70710677
        %v746 = verf.f32.pop %v745
        %v747 = vadd.f32 %v746, 1.0
        %v748 = vmul.f32 %v744, %v747
        %v749 = vstv %s743
        %v750 = vmul.f32 %v749, %v748
        %v751 = vadd.f32 %v732, %v750
        %v752 = vld [vmem:[%s272 + $0x19] sm:$0x1]
        %753 = vset.pattern.permute.xlu0 25
        %754 = vperm.xlu0 %753, %v275
        %v755 = vpop.permute.xlu0 %754
        %v757 = vlaneseq
        %v758 = vshrl.u32 %v757, 7
        %v759 = vsub.s32 0, %v758
        %v760 = vrot.slane %v752, %v759
        %v761 = vadd.f32 %v755, %v760
        %s762 = sld [smem:[#allocation3 + $0x19]]
        %v763 = vmul.f32 %v761, 0.5
        %v764 = vmul.f32 %v761, 0.70710677
        %v765 = verf.f32.pop %v764
        %v766 = vadd.f32 %v765, 1.0
        %v767 = vmul.f32 %v763, %v766
        %v768 = vstv %s762
        %v769 = vmul.f32 %v768, %v767
        %v770 = vadd.f32 %v751, %v769
        %v771 = vld [vmem:[%s272 + $0x1a] sm:$0x1]
        %772 = vset.pattern.permute.xlu0 26
        %773 = vperm.xlu0 %772, %v275
        %v774 = vpop.permute.xlu0 %773
        %v776 = vlaneseq
        %v777 = vshrl.u32 %v776, 7
        %v778 = vsub.s32 0, %v777
        %v779 = vrot.slane %v771, %v778
        %v780 = vadd.f32 %v774, %v779
        %s781 = sld [smem:[#allocation3 + $0x1a]]
        %v782 = vmul.f32 %v780, 0.5
        %v783 = vmul.f32 %v780, 0.70710677
        %v784 = verf.f32.pop %v783
        %v785 = vadd.f32 %v784, 1.0
        %v786 = vmul.f32 %v782, %v785
        %v787 = vstv %s781
        %v788 = vmul.f32 %v787, %v786
        %v789 = vadd.f32 %v770, %v788
        %v790 = vld [vmem:[%s272 + $0x1b] sm:$0x1]
        %791 = vset.pattern.permute.xlu0 27
        %792 = vperm.xlu0 %791, %v275
        %v793 = vpop.permute.xlu0 %792
        %v795 = vlaneseq
        %v796 = vshrl.u32 %v795, 7
        %v797 = vsub.s32 0, %v796
        %v798 = vrot.slane %v790, %v797
        %v799 = vadd.f32 %v793, %v798
        %s800 = sld [smem:[#allocation3 + $0x1b]]
        %v801 = vmul.f32 %v799, 0.5
        %v802 = vmul.f32 %v799, 0.70710677
        %v803 = verf.f32.pop %v802
        %v804 = vadd.f32 %v803, 1.0
        %v805 = vmul.f32 %v801, %v804
        %v806 = vstv %s800
        %v807 = vmul.f32 %v806, %v805
        %v808 = vadd.f32 %v789, %v807
        %v809 = vld [vmem:[%s272 + $0x1c] sm:$0x1]
        %810 = vset.pattern.permute.xlu0 28
        %811 = vperm.xlu0 %810, %v275
        %v812 = vpop.permute.xlu0 %811
        %v814 = vlaneseq
        %v815 = vshrl.u32 %v814, 7
        %v816 = vsub.s32 0, %v815
        %v817 = vrot.slane %v809, %v816
        %v818 = vadd.f32 %v812, %v817
        %s819 = sld [smem:[#allocation3 + $0x1c]]
        %v820 = vmul.f32 %v818, 0.5
        %v821 = vmul.f32 %v818, 0.70710677
        %v822 = verf.f32.pop %v821
        %v823 = vadd.f32 %v822, 1.0
        %v824 = vmul.f32 %v820, %v823
        %v825 = vstv %s819
        %v826 = vmul.f32 %v825, %v824
        %v827 = vadd.f32 %v808, %v826
        %v828 = vld [vmem:[%s272 + $0x1d] sm:$0x1]
        %829 = vset.pattern.permute.xlu0 29
        %830 = vperm.xlu0 %829, %v275
        %v831 = vpop.permute.xlu0 %830
        %v833 = vlaneseq
        %v834 = vshrl.u32 %v833, 7
        %v835 = vsub.s32 0, %v834
        %v836 = vrot.slane %v828, %v835
        %v837 = vadd.f32 %v831, %v836
        %s838 = sld [smem:[#allocation3 + $0x1d]]
        %v839 = vmul.f32 %v837, 0.5
        %v840 = vmul.f32 %v837, 0.70710677
        %v841 = verf.f32.pop %v840
        %v842 = vadd.f32 %v841, 1.0
        %v843 = vmul.f32 %v839, %v842
        %v844 = vstv %s838
        %v845 = vmul.f32 %v844, %v843
        %v846 = vadd.f32 %v827, %v845
        %v847 = vld [vmem:[%s272 + $0x1e] sm:$0x1]
        %848 = vset.pattern.permute.xlu0 30
        %849 = vperm.xlu0 %848, %v275
        %v850 = vpop.permute.xlu0 %849
        %v852 = vlaneseq
        %v853 = vshrl.u32 %v852, 7
        %v854 = vsub.s32 0, %v853
        %v855 = vrot.slane %v847, %v854
        %v856 = vadd.f32 %v850, %v855
        %s857 = sld [smem:[#allocation3 + $0x1e]]
        %v858 = vmul.f32 %v856, 0.5
        %v859 = vmul.f32 %v856, 0.70710677
        %v860 = verf.f32.pop %v859
        %v861 = vadd.f32 %v860, 1.0
        %v862 = vmul.f32 %v858, %v861
        %v863 = vstv %s857
        %v864 = vmul.f32 %v863, %v862
        %v865 = vadd.f32 %v846, %v864
        %v866 = vld [vmem:[%s272 + $0x1f] sm:$0x1]
        %867 = vset.pattern.permute.xlu0 31
        %868 = vperm.xlu0 %867, %v275
        %v869 = vpop.permute.xlu0 %868
        %v871 = vlaneseq
        %v872 = vshrl.u32 %v871, 7
        %v873 = vsub.s32 0, %v872
        %v874 = vrot.slane %v866, %v873
        %v875 = vadd.f32 %v869, %v874
        %s876 = sld [smem:[#allocation3 + $0x1f]]
        %v877 = vmul.f32 %v875, 0.5
        %v878 = vmul.f32 %v875, 0.70710677
        %v879 = verf.f32.pop %v878
        %v880 = vadd.f32 %v879, 1.0
        %v881 = vmul.f32 %v877, %v880
        %v882 = vstv %s876
        %v883 = vmul.f32 %v882, %v881
        %v884 = vadd.f32 %v865, %v883
        %885 = vst [vmem:[%s257] sm:$0xff] %v884
        %s886 = sand.u32 %s149, 1
        %s887 = scalar_lea.sflag [#allocation4], %s886
        %s888 = sand.u32 %s149, 1
        %s889 = smul.addr %s888, 8
        %s890 = scalar_lea.vmem [#allocation6], %s889
        // Predicated region
        $region41: #{cross_out_layer_2.3} parent=35 // pred_check
          %p891 = pneg %p159
        $region42: #{cross_out_layer_2.3} parent=35 // pred_check_branch
          %893 = sbr.rel (%p891) target = $region44
        $region43: #{cross_out_layer_2.3} parent=35 // pred_region
          %s895 = ssub.s32 128, 128
          %896 = vsyncadd %s887, %s895
          %s897 = sadd.s32 %s26, %s27
          %s898 = sadd.s32 %s897, %s25
          %s899 = smul.addr %s898, 128
          %s900 = scalar_lea.hbm %s4, %s899
          %s902 = sshll.u32 %s890, 4
          %s903 = int_to_ptr.vmem [resolvable:$true] %s902
          %905 = dma.vmem_to_hbm [thread:$0]  %s903, 128, %s900, %s887
        $region44: #{cross_out_layer_2.3} parent=35 // pred_fallthru
          _
      $region36: #{cross_out_layer_2.3} parent=5 // pred_fallthru
        _
      %p906 = scmp.le.s32.totalorder 2, %s15
      // Predicated region
      $region45: #{cross_out_layer_2.3} parent=5 // pred_check
        %p907 = pneg %p906
      $region46: #{cross_out_layer_2.3} parent=5 // pred_check_branch
        %909 = sbr.rel (%p907) target = $region48
      $region47: #{cross_out_layer_2.3} parent=5 // pred_region
        %s910 = ssub.s32 %s15, 2
        // Predicated region
        $region49: #{cross_out_layer_2.3} parent=47 // pred_check
          %p911 = pneg %p165
        $region50: #{cross_out_layer_2.3} parent=47 // pred_check_branch
          %913 = sbr.rel (%p911) target = $region52
        $region51: #{cross_out_layer_2.3} parent=47 // pred_region
          %s914 = sand.u32 %s150, 1
          %s915 = scalar_lea.sflag [#allocation4], %s914
          %s916 = sand.u32 %s150, 1
          %s917 = smul.addr %s916, 8
          %s918 = scalar_lea.vmem [#allocation6], %s917
          %919 = dma.done %s915, 128
        $region52: #{cross_out_layer_2.3} parent=47 // pred_fallthru
          _
      $region48: #{cross_out_layer_2.3} parent=5 // pred_fallthru
        _
    $region6: #{cross_out_layer_2.3} parent=1 // loop_footer
      %s19 = sadd.s32 1, %s15
    $region7: #{cross_out_layer_2.3} parent=1 // loop_footer_branch
      %14 = sbr.rel target = $region3
    $region8: #{cross_out_layer_2.3} parent=1 // loop_exit
      _
    %920 = vsyncpa [#allocation4], 1
    %s921 = scalar_lea.sflag [#allocation4], 1
    %922 = vsyncpa %s921, 1
    %923 = vsyncpa [#allocation5], 1
    %s924 = scalar_lea.sflag [#allocation5], 1
    %925 = vsyncpa %s924, 1

</llo_original>
